<compile_context>
chip_gen: v7x
topology: tpu7x:2x2x1
jax: 0.10.0
libtpu: 0.0.40
codegen_flags: <defaults>
</compile_context>

<pallas_src>
import functools

import jax
import jax.numpy as jnp
import numpy as np
from jax.experimental import pallas as pl
from jax.experimental.pallas import tpu as pltpu


# ------------------------------ fused kernel ---------------------------------
def _make_fused_kernel(n_layer, T, B, D, H, C):
    """Builds a kernel: refs = [x, (w_ih,w_hh,b)*n_layer, cls_w, cls_b, out]."""

    def kernel(*refs):
        x_ref = refs[0]
        w_refs = refs[1:1 + 3 * n_layer]
        cw_ref = refs[1 + 3 * n_layer]
        cb_ref = refs[2 + 3 * n_layer]
        o_ref = refs[3 + 3 * n_layer]

        x = x_ref[...]                                    # (B, T, D), f32

        h_last = None
        seq_tm = None                                     # (T*B, H) time-major for layers > 0
        for l in range(n_layer):
            w_ih = w_refs[3 * l][...]                     # (D or H, 4H)
            w_hh = w_refs[3 * l + 1][...]                 # (H, 4H)
            b = w_refs[3 * l + 2][...]                    # (1, 4H)

            # --- hoisted input projection over all timesteps (one MXU push) ---
            if l == 0:
                # batch-major rows: row = b*T + t
                xp = jnp.dot(x.reshape(B * T, D), w_ih,
                             preferred_element_type=jnp.float32) + b
                xp = xp.reshape(B, T, 4 * H)

                def gate_in(t, xp=xp):
                    return xp[:, t, :]                    # (B, 4H) static slice
            else:
                # time-major rows: row = t*B + b
                xp = jnp.dot(seq_tm, w_ih,
                             preferred_element_type=jnp.float32) + b   # (T*B, 4H)

                def gate_in(t, xp=xp):
                    return xp[t * B:(t + 1) * B, :]       # (B, 4H) static slice

            # --- sequential recurrence (fully unrolled; T is static) ---
            h = jnp.zeros((B, H), jnp.float32)
            c = jnp.zeros((B, H), jnp.float32)
            last_layer = (l == n_layer - 1)
            hs = []
            for t in range(T):
                g = gate_in(t) + jnp.dot(h, w_hh,
                                         preferred_element_type=jnp.float32)  # (B, 4H)
                # sigmoid(x) == 0.5*(1 + tanh(0.5*x)); one full-width EUP pass
                # covers the i/f/o gates at once.
                sig = 0.5 * (jnp.tanh(0.5 * g) + 1.0)
                i_g = sig[:, 0 * H:1 * H]
                f_g = sig[:, 1 * H:2 * H]
                o_g = sig[:, 3 * H:4 * H]
                g_g = jnp.tanh(g[:, 2 * H:3 * H])
                c = f_g * c + i_g * g_g
                h = o_g * jnp.tanh(c)
                if not last_layer:
                    hs.append(h)

            if not last_layer:
                seq_tm = jnp.concatenate(hs, axis=0)      # (T*B, H), stays in VMEM
            h_last = h

        # --- fused classifier on the last timestep of the top layer ---
        logits = jnp.dot(h_last, cw_ref[...],
                         preferred_element_type=jnp.float32) + cb_ref[...]
        o_ref[...] = logits.astype(o_ref.dtype)

    return kernel


def _full_block(shape):
    shape = tuple(int(s) for s in shape)
    zeros = (0,) * len(shape)
    return pl.BlockSpec(shape, lambda: zeros)


# ------------------------------- full forward --------------------------------
@jax.jit
def lstm_classifier_forward(x, params):
    """x: (B, T, in_dim) batch_first, like the PyTorch module. Returns (B, n_class)."""
    B, T, D = x.shape
    n_layer = len(params["lstm"])
    H = params["lstm"][0]["w_hh"].shape[0]
    C = params["cls_w"].shape[1]

    flat = [x]
    for layer in params["lstm"]:
        flat += [layer["w_ih"], layer["w_hh"], layer["b"]]
    flat += [params["cls_w"], params["cls_b"]]

    kernel = _make_fused_kernel(n_layer, T, B, D, H, C)
    return pl.pallas_call(
        kernel,
        out_shape=jax.ShapeDtypeStruct((B, C), jnp.float32),
        in_specs=[_full_block(a.shape) for a in flat],
        out_specs=_full_block((B, C)),
    )(*flat)


# ---------------------------- parameter construction --------------------------
def init_params(key, in_dim, hidden_dim, n_layer, n_class):
    """PyTorch-style uniform(-1/sqrt(H), 1/sqrt(H)) init; weights pre-transposed
    to (in, 4H)/(H, 4H) with gate order i|f|g|o; b_ih+b_hh fused."""
    k = 1.0 / np.sqrt(hidden_dim)
    layers = []
    for l in range(n_layer):
        d_in = in_dim if l == 0 else hidden_dim
        key, k1, k2, k3, k4 = jax.random.split(key, 5)
        w_ih = jax.random.uniform(k1, (d_in, 4 * hidden_dim), jnp.float32, -k, k)
        w_hh = jax.random.uniform(k2, (hidden_dim, 4 * hidden_dim), jnp.float32, -k, k)
        b_ih = jax.random.uniform(k3, (4 * hidden_dim,), jnp.float32, -k, k)
        b_hh = jax.random.uniform(k4, (4 * hidden_dim,), jnp.float32, -k, k)
        layers.append({"w_ih": w_ih, "w_hh": w_hh,
                       "b": (b_ih + b_hh).reshape(1, 4 * hidden_dim)})
    key, k5, k6 = jax.random.split(key, 3)
    cls_w = jax.random.uniform(k5, (hidden_dim, n_class), jnp.float32, -k, k)
    cls_b = jax.random.uniform(k6, (1, n_class), jnp.float32, -k, k)
    return {"lstm": layers, "cls_w": cls_w, "cls_b": cls_b}


# ------------------------------- JAX reference --------------------------------
def reference_forward(x, params):
    x_tm = jnp.transpose(x, (1, 0, 2))
    B = x.shape[0]
    for layer in params["lstm"]:
        H = layer["w_hh"].shape[0]

        def step(carry, x_t, layer=layer, H=H):
            h, c = carry
            g = x_t @ layer["w_ih"] + h @ layer["w_hh"] + layer["b"][0]
            i = jax.nn.sigmoid(g[:, 0 * H:1 * H])
            f = jax.nn.sigmoid(g[:, 1 * H:2 * H])
            gg = jnp.tanh(g[:, 2 * H:3 * H])
            o = jax.nn.sigmoid(g[:, 3 * H:4 * H])
            c = f * c + i * gg
            h = o * jnp.tanh(c)
            return (h, c), h

        init = (jnp.zeros((B, H), jnp.float32), jnp.zeros((B, H), jnp.float32))
        _, hs = jax.lax.scan(step, init, x_tm)
        x_tm = hs
    return x_tm[-1] @ params["cls_w"] + params["cls_b"][0]


# ------------------------------------ main ------------------------------------
if __name__ == "__main__":
    in_dim, hidden_dim, n_layer, n_class = 16, 32, 2, 4
    batch, seq = 2, 8

    key = jax.random.PRNGKey(0)
    key, kx, kp = jax.random.split(key, 3)
    x = jax.random.normal(kx, (batch, seq, in_dim), jnp.float32)
    params = init_params(kp, in_dim, hidden_dim, n_layer, n_class)

    out = jax.block_until_ready(lstm_classifier_forward(x, params))
    ref = jax.block_until_ready(reference_forward(x, params))

    assert out.shape == (batch, n_class)
    np.testing.assert_allclose(np.asarray(out), np.asarray(ref), atol=2e-3, rtol=2e-3)

    print("KERNEL_OK")
</pallas_src>

<mosaic_0001>
module attributes {stable_mosaic.version = 11 : i64} {
  func.func @kernel(%arg0: memref<2x8x16xf32, #tpu.memory_space<vmem>>, %arg1: memref<16x128xf32, #tpu.memory_space<vmem>>, %arg2: memref<32x128xf32, #tpu.memory_space<vmem>>, %arg3: memref<1x128xf32, #tpu.memory_space<vmem>>, %arg4: memref<32x128xf32, #tpu.memory_space<vmem>>, %arg5: memref<32x128xf32, #tpu.memory_space<vmem>>, %arg6: memref<1x128xf32, #tpu.memory_space<vmem>>, %arg7: memref<32x4xf32, #tpu.memory_space<vmem>>, %arg8: memref<1x4xf32, #tpu.memory_space<vmem>>, %arg9: memref<2x4xf32, #tpu.memory_space<vmem>>) attributes {dimension_semantics = [], scalar_prefetch = 0 : i64, scratch_operands = 0 : i64, tpu.core_type = #tpu.core_type<tc>} {
    %c0 = arith.constant 0 : index
    %c0_0 = arith.constant 0 : index
    %c0_1 = arith.constant 0 : index
    %0 = vector.load %arg0[%c0, %c0_0, %c0_1] : memref<2x8x16xf32, #tpu.memory_space<vmem>>, vector<2x8x16xf32>
    %c0_2 = arith.constant 0 : index
    %c0_3 = arith.constant 0 : index
    %1 = vector.load %arg1[%c0_2, %c0_3] : memref<16x128xf32, #tpu.memory_space<vmem>>, vector<16x128xf32>
    %c0_4 = arith.constant 0 : index
    %c0_5 = arith.constant 0 : index
    %2 = vector.load %arg2[%c0_4, %c0_5] : memref<32x128xf32, #tpu.memory_space<vmem>>, vector<32x128xf32>
    %c0_6 = arith.constant 0 : index
    %c0_7 = arith.constant 0 : index
    %3 = vector.load %arg3[%c0_6, %c0_7] : memref<1x128xf32, #tpu.memory_space<vmem>>, vector<1x128xf32>
    %4 = vector.shape_cast %0 : vector<2x8x16xf32> to vector<16x16xf32>
    %cst = arith.constant dense<0.000000e+00> : vector<16x128xf32>
    %5 = tpu.matmul %4, %1, %cst {dimension_numbers = #tpu.dot_dimension_numbers<[1], [0], [0], [1], [0, 0, 1, 1], [], []>} : vector<16x16xf32>, vector<16x128xf32>, vector<16x128xf32> -> vector<16x128xf32>
    %6 = vector.broadcast %3 : vector<1x128xf32> to vector<16x128xf32>
    %7 = arith.addf %5, %6 : vector<16x128xf32>
    %8 = vector.shape_cast %7 : vector<16x128xf32> to vector<2x8x128xf32>
    %cst_8 = arith.constant 0.000000e+00 : f32
    %9 = vector.broadcast %cst_8 : f32 to vector<2x32xf32>
    %cst_9 = arith.constant 0.000000e+00 : f32
    %10 = vector.broadcast %cst_9 : f32 to vector<2x32xf32>
    %11 = vector.extract_strided_slice %8 {offsets = [0, 0, 0], sizes = [2, 1, 128], strides = [1, 1, 1]} : vector<2x8x128xf32> to vector<2x1x128xf32>
    %12 = vector.shape_cast %11 : vector<2x1x128xf32> to vector<2x128xf32>
    %cst_10 = arith.constant dense<0.000000e+00> : vector<2x128xf32>
    %13 = tpu.matmul %9, %2, %cst_10 {dimension_numbers = #tpu.dot_dimension_numbers<[1], [0], [0], [1], [0, 0, 1, 1], [], []>} : vector<2x32xf32>, vector<32x128xf32>, vector<2x128xf32> -> vector<2x128xf32>
    %14 = arith.addf %12, %13 : vector<2x128xf32>
    %cst_11 = arith.constant 5.000000e-01 : f32
    %15 = vector.broadcast %cst_11 : f32 to vector<2x128xf32>
    %16 = arith.mulf %15, %14 : vector<2x128xf32>
    %17 = math.tanh %16 : vector<2x128xf32>
    %cst_12 = arith.constant 1.000000e+00 : f32
    %18 = vector.broadcast %cst_12 : f32 to vector<2x128xf32>
    %19 = arith.addf %17, %18 : vector<2x128xf32>
    %cst_13 = arith.constant 5.000000e-01 : f32
    %20 = vector.broadcast %cst_13 : f32 to vector<2x128xf32>
    %21 = arith.mulf %20, %19 : vector<2x128xf32>
    %22 = vector.extract_strided_slice %21 {offsets = [0, 0], sizes = [2, 32], strides = [1, 1]} : vector<2x128xf32> to vector<2x32xf32>
    %23 = vector.extract_strided_slice %21 {offsets = [0, 32], sizes = [2, 32], strides = [1, 1]} : vector<2x128xf32> to vector<2x32xf32>
    %24 = vector.extract_strided_slice %21 {offsets = [0, 96], sizes = [2, 32], strides = [1, 1]} : vector<2x128xf32> to vector<2x32xf32>
    %25 = vector.extract_strided_slice %14 {offsets = [0, 64], sizes = [2, 32], strides = [1, 1]} : vector<2x128xf32> to vector<2x32xf32>
    %26 = math.tanh %25 : vector<2x32xf32>
    %27 = arith.mulf %23, %10 : vector<2x32xf32>
    %28 = arith.mulf %22, %26 : vector<2x32xf32>
    %29 = arith.addf %27, %28 : vector<2x32xf32>
    %30 = math.tanh %29 : vector<2x32xf32>
    %31 = arith.mulf %24, %30 : vector<2x32xf32>
    %32 = vector.extract_strided_slice %8 {offsets = [0, 1, 0], sizes = [2, 1, 128], strides = [1, 1, 1]} : vector<2x8x128xf32> to vector<2x1x128xf32>
    %33 = vector.shape_cast %32 : vector<2x1x128xf32> to vector<2x128xf32>
    %cst_14 = arith.constant dense<0.000000e+00> : vector<2x128xf32>
    %34 = tpu.matmul %31, %2, %cst_14 {dimension_numbers = #tpu.dot_dimension_numbers<[1], [0], [0], [1], [0, 0, 1, 1], [], []>} : vector<2x32xf32>, vector<32x128xf32>, vector<2x128xf32> -> vector<2x128xf32>
    %35 = arith.addf %33, %34 : vector<2x128xf32>
    %cst_15 = arith.constant 5.000000e-01 : f32
    %36 = vector.broadcast %cst_15 : f32 to vector<2x128xf32>
    %37 = arith.mulf %36, %35 : vector<2x128xf32>
    %38 = math.tanh %37 : vector<2x128xf32>
    %cst_16 = arith.constant 1.000000e+00 : f32
    %39 = vector.broadcast %cst_16 : f32 to vector<2x128xf32>
    %40 = arith.addf %38, %39 : vector<2x128xf32>
    %cst_17 = arith.constant 5.000000e-01 : f32
    %41 = vector.broadcast %cst_17 : f32 to vector<2x128xf32>
    %42 = arith.mulf %41, %40 : vector<2x128xf32>
    %43 = vector.extract_strided_slice %42 {offsets = [0, 0], sizes = [2, 32], strides = [1, 1]} : vector<2x128xf32> to vector<2x32xf32>
    %44 = vector.extract_strided_slice %42 {offsets = [0, 32], sizes = [2, 32], strides = [1, 1]} : vector<2x128xf32> to vector<2x32xf32>
    %45 = vector.extract_strided_slice %42 {offsets = [0, 96], sizes = [2, 32], strides = [1, 1]} : vector<2x128xf32> to vector<2x32xf32>
    %46 = vector.extract_strided_slice %35 {offsets = [0, 64], sizes = [2, 32], strides = [1, 1]} : vector<2x128xf32> to vector<2x32xf32>
    %47 = math.tanh %46 : vector<2x32xf32>
    %48 = arith.mulf %44, %29 : vector<2x32xf32>
    %49 = arith.mulf %43, %47 : vector<2x32xf32>
    %50 = arith.addf %48, %49 : vector<2x32xf32>
    %51 = math.tanh %50 : vector<2x32xf32>
    %52 = arith.mulf %45, %51 : vector<2x32xf32>
    %53 = vector.extract_strided_slice %8 {offsets = [0, 2, 0], sizes = [2, 1, 128], strides = [1, 1, 1]} : vector<2x8x128xf32> to vector<2x1x128xf32>
    %54 = vector.shape_cast %53 : vector<2x1x128xf32> to vector<2x128xf32>
    %cst_18 = arith.constant dense<0.000000e+00> : vector<2x128xf32>
    %55 = tpu.matmul %52, %2, %cst_18 {dimension_numbers = #tpu.dot_dimension_numbers<[1], [0], [0], [1], [0, 0, 1, 1], [], []>} : vector<2x32xf32>, vector<32x128xf32>, vector<2x128xf32> -> vector<2x128xf32>
    %56 = arith.addf %54, %55 : vector<2x128xf32>
    %cst_19 = arith.constant 5.000000e-01 : f32
    %57 = vector.broadcast %cst_19 : f32 to vector<2x128xf32>
    %58 = arith.mulf %57, %56 : vector<2x128xf32>
    %59 = math.tanh %58 : vector<2x128xf32>
    %cst_20 = arith.constant 1.000000e+00 : f32
    %60 = vector.broadcast %cst_20 : f32 to vector<2x128xf32>
    %61 = arith.addf %59, %60 : vector<2x128xf32>
    %cst_21 = arith.constant 5.000000e-01 : f32
    %62 = vector.broadcast %cst_21 : f32 to vector<2x128xf32>
    %63 = arith.mulf %62, %61 : vector<2x128xf32>
    %64 = vector.extract_strided_slice %63 {offsets = [0, 0], sizes = [2, 32], strides = [1, 1]} : vector<2x128xf32> to vector<2x32xf32>
    %65 = vector.extract_strided_slice %63 {offsets = [0, 32], sizes = [2, 32], strides = [1, 1]} : vector<2x128xf32> to vector<2x32xf32>
    %66 = vector.extract_strided_slice %63 {offsets = [0, 96], sizes = [2, 32], strides = [1, 1]} : vector<2x128xf32> to vector<2x32xf32>
    %67 = vector.extract_strided_slice %56 {offsets = [0, 64], sizes = [2, 32], strides = [1, 1]} : vector<2x128xf32> to vector<2x32xf32>
    %68 = math.tanh %67 : vector<2x32xf32>
    %69 = arith.mulf %65, %50 : vector<2x32xf32>
    %70 = arith.mulf %64, %68 : vector<2x32xf32>
    %71 = arith.addf %69, %70 : vector<2x32xf32>
    %72 = math.tanh %71 : vector<2x32xf32>
    %73 = arith.mulf %66, %72 : vector<2x32xf32>
    %74 = vector.extract_strided_slice %8 {offsets = [0, 3, 0], sizes = [2, 1, 128], strides = [1, 1, 1]} : vector<2x8x128xf32> to vector<2x1x128xf32>
    %75 = vector.shape_cast %74 : vector<2x1x128xf32> to vector<2x128xf32>
    %cst_22 = arith.constant dense<0.000000e+00> : vector<2x128xf32>
    %76 = tpu.matmul %73, %2, %cst_22 {dimension_numbers = #tpu.dot_dimension_numbers<[1], [0], [0], [1], [0, 0, 1, 1], [], []>} : vector<2x32xf32>, vector<32x128xf32>, vector<2x128xf32> -> vector<2x128xf32>
    %77 = arith.addf %75, %76 : vector<2x128xf32>
    %cst_23 = arith.constant 5.000000e-01 : f32
    %78 = vector.broadcast %cst_23 : f32 to vector<2x128xf32>
    %79 = arith.mulf %78, %77 : vector<2x128xf32>
    %80 = math.tanh %79 : vector<2x128xf32>
    %cst_24 = arith.constant 1.000000e+00 : f32
    %81 = vector.broadcast %cst_24 : f32 to vector<2x128xf32>
    %82 = arith.addf %80, %81 : vector<2x128xf32>
    %cst_25 = arith.constant 5.000000e-01 : f32
    %83 = vector.broadcast %cst_25 : f32 to vector<2x128xf32>
    %84 = arith.mulf %83, %82 : vector<2x128xf32>
    %85 = vector.extract_strided_slice %84 {offsets = [0, 0], sizes = [2, 32], strides = [1, 1]} : vector<2x128xf32> to vector<2x32xf32>
    %86 = vector.extract_strided_slice %84 {offsets = [0, 32], sizes = [2, 32], strides = [1, 1]} : vector<2x128xf32> to vector<2x32xf32>
    %87 = vector.extract_strided_slice %84 {offsets = [0, 96], sizes = [2, 32], strides = [1, 1]} : vector<2x128xf32> to vector<2x32xf32>
    %88 = vector.extract_strided_slice %77 {offsets = [0, 64], sizes = [2, 32], strides = [1, 1]} : vector<2x128xf32> to vector<2x32xf32>
    %89 = math.tanh %88 : vector<2x32xf32>
    %90 = arith.mulf %86, %71 : vector<2x32xf32>
    %91 = arith.mulf %85, %89 : vector<2x32xf32>
    %92 = arith.addf %90, %91 : vector<2x32xf32>
    %93 = math.tanh %92 : vector<2x32xf32>
    %94 = arith.mulf %87, %93 : vector<2x32xf32>
    %95 = vector.extract_strided_slice %8 {offsets = [0, 4, 0], sizes = [2, 1, 128], strides = [1, 1, 1]} : vector<2x8x128xf32> to vector<2x1x128xf32>
    %96 = vector.shape_cast %95 : vector<2x1x128xf32> to vector<2x128xf32>
    %cst_26 = arith.constant dense<0.000000e+00> : vector<2x128xf32>
    %97 = tpu.matmul %94, %2, %cst_26 {dimension_numbers = #tpu.dot_dimension_numbers<[1], [0], [0], [1], [0, 0, 1, 1], [], []>} : vector<2x32xf32>, vector<32x128xf32>, vector<2x128xf32> -> vector<2x128xf32>
    %98 = arith.addf %96, %97 : vector<2x128xf32>
    %cst_27 = arith.constant 5.000000e-01 : f32
    %99 = vector.broadcast %cst_27 : f32 to vector<2x128xf32>
    %100 = arith.mulf %99, %98 : vector<2x128xf32>
    %101 = math.tanh %100 : vector<2x128xf32>
    %cst_28 = arith.constant 1.000000e+00 : f32
    %102 = vector.broadcast %cst_28 : f32 to vector<2x128xf32>
    %103 = arith.addf %101, %102 : vector<2x128xf32>
    %cst_29 = arith.constant 5.000000e-01 : f32
    %104 = vector.broadcast %cst_29 : f32 to vector<2x128xf32>
    %105 = arith.mulf %104, %103 : vector<2x128xf32>
    %106 = vector.extract_strided_slice %105 {offsets = [0, 0], sizes = [2, 32], strides = [1, 1]} : vector<2x128xf32> to vector<2x32xf32>
    %107 = vector.extract_strided_slice %105 {offsets = [0, 32], sizes = [2, 32], strides = [1, 1]} : vector<2x128xf32> to vector<2x32xf32>
    %108 = vector.extract_strided_slice %105 {offsets = [0, 96], sizes = [2, 32], strides = [1, 1]} : vector<2x128xf32> to vector<2x32xf32>
    %109 = vector.extract_strided_slice %98 {offsets = [0, 64], sizes = [2, 32], strides = [1, 1]} : vector<2x128xf32> to vector<2x32xf32>
    %110 = math.tanh %109 : vector<2x32xf32>
    %111 = arith.mulf %107, %92 : vector<2x32xf32>
    %112 = arith.mulf %106, %110 : vector<2x32xf32>
    %113 = arith.addf %111, %112 : vector<2x32xf32>
    %114 = math.tanh %113 : vector<2x32xf32>
    %115 = arith.mulf %108, %114 : vector<2x32xf32>
    %116 = vector.extract_strided_slice %8 {offsets = [0, 5, 0], sizes = [2, 1, 128], strides = [1, 1, 1]} : vector<2x8x128xf32> to vector<2x1x128xf32>
    %117 = vector.shape_cast %116 : vector<2x1x128xf32> to vector<2x128xf32>
    %cst_30 = arith.constant dense<0.000000e+00> : vector<2x128xf32>
    %118 = tpu.matmul %115, %2, %cst_30 {dimension_numbers = #tpu.dot_dimension_numbers<[1], [0], [0], [1], [0, 0, 1, 1], [], []>} : vector<2x32xf32>, vector<32x128xf32>, vector<2x128xf32> -> vector<2x128xf32>
    %119 = arith.addf %117, %118 : vector<2x128xf32>
    %cst_31 = arith.constant 5.000000e-01 : f32
    %120 = vector.broadcast %cst_31 : f32 to vector<2x128xf32>
    %121 = arith.mulf %120, %119 : vector<2x128xf32>
    %122 = math.tanh %121 : vector<2x128xf32>
    %cst_32 = arith.constant 1.000000e+00 : f32
    %123 = vector.broadcast %cst_32 : f32 to vector<2x128xf32>
    %124 = arith.addf %122, %123 : vector<2x128xf32>
    %cst_33 = arith.constant 5.000000e-01 : f32
    %125 = vector.broadcast %cst_33 : f32 to vector<2x128xf32>
    %126 = arith.mulf %125, %124 : vector<2x128xf32>
    %127 = vector.extract_strided_slice %126 {offsets = [0, 0], sizes = [2, 32], strides = [1, 1]} : vector<2x128xf32> to vector<2x32xf32>
    %128 = vector.extract_strided_slice %126 {offsets = [0, 32], sizes = [2, 32], strides = [1, 1]} : vector<2x128xf32> to vector<2x32xf32>
    %129 = vector.extract_strided_slice %126 {offsets = [0, 96], sizes = [2, 32], strides = [1, 1]} : vector<2x128xf32> to vector<2x32xf32>
    %130 = vector.extract_strided_slice %119 {offsets = [0, 64], sizes = [2, 32], strides = [1, 1]} : vector<2x128xf32> to vector<2x32xf32>
    %131 = math.tanh %130 : vector<2x32xf32>
    %132 = arith.mulf %128, %113 : vector<2x32xf32>
    %133 = arith.mulf %127, %131 : vector<2x32xf32>
    %134 = arith.addf %132, %133 : vector<2x32xf32>
    %135 = math.tanh %134 : vector<2x32xf32>
    %136 = arith.mulf %129, %135 : vector<2x32xf32>
    %137 = vector.extract_strided_slice %8 {offsets = [0, 6, 0], sizes = [2, 1, 128], strides = [1, 1, 1]} : vector<2x8x128xf32> to vector<2x1x128xf32>
    %138 = vector.shape_cast %137 : vector<2x1x128xf32> to vector<2x128xf32>
    %cst_34 = arith.constant dense<0.000000e+00> : vector<2x128xf32>
    %139 = tpu.matmul %136, %2, %cst_34 {dimension_numbers = #tpu.dot_dimension_numbers<[1], [0], [0], [1], [0, 0, 1, 1], [], []>} : vector<2x32xf32>, vector<32x128xf32>, vector<2x128xf32> -> vector<2x128xf32>
    %140 = arith.addf %138, %139 : vector<2x128xf32>
    %cst_35 = arith.constant 5.000000e-01 : f32
    %141 = vector.broadcast %cst_35 : f32 to vector<2x128xf32>
    %142 = arith.mulf %141, %140 : vector<2x128xf32>
    %143 = math.tanh %142 : vector<2x128xf32>
    %cst_36 = arith.constant 1.000000e+00 : f32
    %144 = vector.broadcast %cst_36 : f32 to vector<2x128xf32>
    %145 = arith.addf %143, %144 : vector<2x128xf32>
    %cst_37 = arith.constant 5.000000e-01 : f32
    %146 = vector.broadcast %cst_37 : f32 to vector<2x128xf32>
    %147 = arith.mulf %146, %145 : vector<2x128xf32>
    %148 = vector.extract_strided_slice %147 {offsets = [0, 0], sizes = [2, 32], strides = [1, 1]} : vector<2x128xf32> to vector<2x32xf32>
    %149 = vector.extract_strided_slice %147 {offsets = [0, 32], sizes = [2, 32], strides = [1, 1]} : vector<2x128xf32> to vector<2x32xf32>
    %150 = vector.extract_strided_slice %147 {offsets = [0, 96], sizes = [2, 32], strides = [1, 1]} : vector<2x128xf32> to vector<2x32xf32>
    %151 = vector.extract_strided_slice %140 {offsets = [0, 64], sizes = [2, 32], strides = [1, 1]} : vector<2x128xf32> to vector<2x32xf32>
    %152 = math.tanh %151 : vector<2x32xf32>
    %153 = arith.mulf %149, %134 : vector<2x32xf32>
    %154 = arith.mulf %148, %152 : vector<2x32xf32>
    %155 = arith.addf %153, %154 : vector<2x32xf32>
    %156 = math.tanh %155 : vector<2x32xf32>
    %157 = arith.mulf %150, %156 : vector<2x32xf32>
    %158 = vector.extract_strided_slice %8 {offsets = [0, 7, 0], sizes = [2, 1, 128], strides = [1, 1, 1]} : vector<2x8x128xf32> to vector<2x1x128xf32>
    %159 = vector.shape_cast %158 : vector<2x1x128xf32> to vector<2x128xf32>
    %cst_38 = arith.constant dense<0.000000e+00> : vector<2x128xf32>
    %160 = tpu.matmul %157, %2, %cst_38 {dimension_numbers = #tpu.dot_dimension_numbers<[1], [0], [0], [1], [0, 0, 1, 1], [], []>} : vector<2x32xf32>, vector<32x128xf32>, vector<2x128xf32> -> vector<2x128xf32>
    %161 = arith.addf %159, %160 : vector<2x128xf32>
    %cst_39 = arith.constant 5.000000e-01 : f32
    %162 = vector.broadcast %cst_39 : f32 to vector<2x128xf32>
    %163 = arith.mulf %162, %161 : vector<2x128xf32>
    %164 = math.tanh %163 : vector<2x128xf32>
    %cst_40 = arith.constant 1.000000e+00 : f32
    %165 = vector.broadcast %cst_40 : f32 to vector<2x128xf32>
    %166 = arith.addf %164, %165 : vector<2x128xf32>
    %cst_41 = arith.constant 5.000000e-01 : f32
    %167 = vector.broadcast %cst_41 : f32 to vector<2x128xf32>
    %168 = arith.mulf %167, %166 : vector<2x128xf32>
    %169 = vector.extract_strided_slice %168 {offsets = [0, 0], sizes = [2, 32], strides = [1, 1]} : vector<2x128xf32> to vector<2x32xf32>
    %170 = vector.extract_strided_slice %168 {offsets = [0, 32], sizes = [2, 32], strides = [1, 1]} : vector<2x128xf32> to vector<2x32xf32>
    %171 = vector.extract_strided_slice %168 {offsets = [0, 96], sizes = [2, 32], strides = [1, 1]} : vector<2x128xf32> to vector<2x32xf32>
    %172 = vector.extract_strided_slice %161 {offsets = [0, 64], sizes = [2, 32], strides = [1, 1]} : vector<2x128xf32> to vector<2x32xf32>
    %173 = math.tanh %172 : vector<2x32xf32>
    %174 = arith.mulf %170, %155 : vector<2x32xf32>
    %175 = arith.mulf %169, %173 : vector<2x32xf32>
    %176 = arith.addf %174, %175 : vector<2x32xf32>
    %177 = math.tanh %176 : vector<2x32xf32>
    %178 = arith.mulf %171, %177 : vector<2x32xf32>
    %179 = tpu.concatenate %31, %52, %73, %94, %115, %136, %157, %178 in 0 : vector<2x32xf32>, vector<2x32xf32>, vector<2x32xf32>, vector<2x32xf32>, vector<2x32xf32>, vector<2x32xf32>, vector<2x32xf32>, vector<2x32xf32> -> vector<16x32xf32>
    %c0_42 = arith.constant 0 : index
    %c0_43 = arith.constant 0 : index
    %180 = vector.load %arg4[%c0_42, %c0_43] : memref<32x128xf32, #tpu.memory_space<vmem>>, vector<32x128xf32>
    %c0_44 = arith.constant 0 : index
    %c0_45 = arith.constant 0 : index
    %181 = vector.load %arg5[%c0_44, %c0_45] : memref<32x128xf32, #tpu.memory_space<vmem>>, vector<32x128xf32>
    %c0_46 = arith.constant 0 : index
    %c0_47 = arith.constant 0 : index
    %182 = vector.load %arg6[%c0_46, %c0_47] : memref<1x128xf32, #tpu.memory_space<vmem>>, vector<1x128xf32>
    %cst_48 = arith.constant dense<0.000000e+00> : vector<16x128xf32>
    %183 = tpu.matmul %179, %180, %cst_48 {dimension_numbers = #tpu.dot_dimension_numbers<[1], [0], [0], [1], [0, 0, 1, 1], [], []>} : vector<16x32xf32>, vector<32x128xf32>, vector<16x128xf32> -> vector<16x128xf32>
    %184 = vector.broadcast %182 : vector<1x128xf32> to vector<16x128xf32>
    %185 = arith.addf %183, %184 : vector<16x128xf32>
    %cst_49 = arith.constant 0.000000e+00 : f32
    %186 = vector.broadcast %cst_49 : f32 to vector<2x32xf32>
    %cst_50 = arith.constant 0.000000e+00 : f32
    %187 = vector.broadcast %cst_50 : f32 to vector<2x32xf32>
    %188 = vector.extract_strided_slice %185 {offsets = [0, 0], sizes = [2, 128], strides = [1, 1]} : vector<16x128xf32> to vector<2x128xf32>
    %cst_51 = arith.constant dense<0.000000e+00> : vector<2x128xf32>
    %189 = tpu.matmul %186, %181, %cst_51 {dimension_numbers = #tpu.dot_dimension_numbers<[1], [0], [0], [1], [0, 0, 1, 1], [], []>} : vector<2x32xf32>, vector<32x128xf32>, vector<2x128xf32> -> vector<2x128xf32>
    %190 = arith.addf %188, %189 : vector<2x128xf32>
    %cst_52 = arith.constant 5.000000e-01 : f32
    %191 = vector.broadcast %cst_52 : f32 to vector<2x128xf32>
    %192 = arith.mulf %191, %190 : vector<2x128xf32>
    %193 = math.tanh %192 : vector<2x128xf32>
    %cst_53 = arith.constant 1.000000e+00 : f32
    %194 = vector.broadcast %cst_53 : f32 to vector<2x128xf32>
    %195 = arith.addf %193, %194 : vector<2x128xf32>
    %cst_54 = arith.constant 5.000000e-01 : f32
    %196 = vector.broadcast %cst_54 : f32 to vector<2x128xf32>
    %197 = arith.mulf %196, %195 : vector<2x128xf32>
    %198 = vector.extract_strided_slice %197 {offsets = [0, 0], sizes = [2, 32], strides = [1, 1]} : vector<2x128xf32> to vector<2x32xf32>
    %199 = vector.extract_strided_slice %197 {offsets = [0, 32], sizes = [2, 32], strides = [1, 1]} : vector<2x128xf32> to vector<2x32xf32>
    %200 = vector.extract_strided_slice %197 {offsets = [0, 96], sizes = [2, 32], strides = [1, 1]} : vector<2x128xf32> to vector<2x32xf32>
    %201 = vector.extract_strided_slice %190 {offsets = [0, 64], sizes = [2, 32], strides = [1, 1]} : vector<2x128xf32> to vector<2x32xf32>
    %202 = math.tanh %201 : vector<2x32xf32>
    %203 = arith.mulf %199, %187 : vector<2x32xf32>
    %204 = arith.mulf %198, %202 : vector<2x32xf32>
    %205 = arith.addf %203, %204 : vector<2x32xf32>
    %206 = math.tanh %205 : vector<2x32xf32>
    %207 = arith.mulf %200, %206 : vector<2x32xf32>
    %208 = vector.extract_strided_slice %185 {offsets = [2, 0], sizes = [2, 128], strides = [1, 1]} : vector<16x128xf32> to vector<2x128xf32>
    %cst_55 = arith.constant dense<0.000000e+00> : vector<2x128xf32>
    %209 = tpu.matmul %207, %181, %cst_55 {dimension_numbers = #tpu.dot_dimension_numbers<[1], [0], [0], [1], [0, 0, 1, 1], [], []>} : vector<2x32xf32>, vector<32x128xf32>, vector<2x128xf32> -> vector<2x128xf32>
    %210 = arith.addf %208, %209 : vector<2x128xf32>
    %cst_56 = arith.constant 5.000000e-01 : f32
    %211 = vector.broadcast %cst_56 : f32 to vector<2x128xf32>
    %212 = arith.mulf %211, %210 : vector<2x128xf32>
    %213 = math.tanh %212 : vector<2x128xf32>
    %cst_57 = arith.constant 1.000000e+00 : f32
    %214 = vector.broadcast %cst_57 : f32 to vector<2x128xf32>
    %215 = arith.addf %213, %214 : vector<2x128xf32>
    %cst_58 = arith.constant 5.000000e-01 : f32
    %216 = vector.broadcast %cst_58 : f32 to vector<2x128xf32>
    %217 = arith.mulf %216, %215 : vector<2x128xf32>
    %218 = vector.extract_strided_slice %217 {offsets = [0, 0], sizes = [2, 32], strides = [1, 1]} : vector<2x128xf32> to vector<2x32xf32>
    %219 = vector.extract_strided_slice %217 {offsets = [0, 32], sizes = [2, 32], strides = [1, 1]} : vector<2x128xf32> to vector<2x32xf32>
    %220 = vector.extract_strided_slice %217 {offsets = [0, 96], sizes = [2, 32], strides = [1, 1]} : vector<2x128xf32> to vector<2x32xf32>
    %221 = vector.extract_strided_slice %210 {offsets = [0, 64], sizes = [2, 32], strides = [1, 1]} : vector<2x128xf32> to vector<2x32xf32>
    %222 = math.tanh %221 : vector<2x32xf32>
    %223 = arith.mulf %219, %205 : vector<2x32xf32>
    %224 = arith.mulf %218, %222 : vector<2x32xf32>
    %225 = arith.addf %223, %224 : vector<2x32xf32>
    %226 = math.tanh %225 : vector<2x32xf32>
    %227 = arith.mulf %220, %226 : vector<2x32xf32>
    %228 = vector.extract_strided_slice %185 {offsets = [4, 0], sizes = [2, 128], strides = [1, 1]} : vector<16x128xf32> to vector<2x128xf32>
    %cst_59 = arith.constant dense<0.000000e+00> : vector<2x128xf32>
    %229 = tpu.matmul %227, %181, %cst_59 {dimension_numbers = #tpu.dot_dimension_numbers<[1], [0], [0], [1], [0, 0, 1, 1], [], []>} : vector<2x32xf32>, vector<32x128xf32>, vector<2x128xf32> -> vector<2x128xf32>
    %230 = arith.addf %228, %229 : vector<2x128xf32>
    %cst_60 = arith.constant 5.000000e-01 : f32
    %231 = vector.broadcast %cst_60 : f32 to vector<2x128xf32>
    %232 = arith.mulf %231, %230 : vector<2x128xf32>
    %233 = math.tanh %232 : vector<2x128xf32>
    %cst_61 = arith.constant 1.000000e+00 : f32
    %234 = vector.broadcast %cst_61 : f32 to vector<2x128xf32>
    %235 = arith.addf %233, %234 : vector<2x128xf32>
    %cst_62 = arith.constant 5.000000e-01 : f32
    %236 = vector.broadcast %cst_62 : f32 to vector<2x128xf32>
    %237 = arith.mulf %236, %235 : vector<2x128xf32>
    %238 = vector.extract_strided_slice %237 {offsets = [0, 0], sizes = [2, 32], strides = [1, 1]} : vector<2x128xf32> to vector<2x32xf32>
    %239 = vector.extract_strided_slice %237 {offsets = [0, 32], sizes = [2, 32], strides = [1, 1]} : vector<2x128xf32> to vector<2x32xf32>
    %240 = vector.extract_strided_slice %237 {offsets = [0, 96], sizes = [2, 32], strides = [1, 1]} : vector<2x128xf32> to vector<2x32xf32>
    %241 = vector.extract_strided_slice %230 {offsets = [0, 64], sizes = [2, 32], strides = [1, 1]} : vector<2x128xf32> to vector<2x32xf32>
    %242 = math.tanh %241 : vector<2x32xf32>
    %243 = arith.mulf %239, %225 : vector<2x32xf32>
    %244 = arith.mulf %238, %242 : vector<2x32xf32>
    %245 = arith.addf %243, %244 : vector<2x32xf32>
    %246 = math.tanh %245 : vector<2x32xf32>
    %247 = arith.mulf %240, %246 : vector<2x32xf32>
    %248 = vector.extract_strided_slice %185 {offsets = [6, 0], sizes = [2, 128], strides = [1, 1]} : vector<16x128xf32> to vector<2x128xf32>
    %cst_63 = arith.constant dense<0.000000e+00> : vector<2x128xf32>
    %249 = tpu.matmul %247, %181, %cst_63 {dimension_numbers = #tpu.dot_dimension_numbers<[1], [0], [0], [1], [0, 0, 1, 1], [], []>} : vector<2x32xf32>, vector<32x128xf32>, vector<2x128xf32> -> vector<2x128xf32>
    %250 = arith.addf %248, %249 : vector<2x128xf32>
    %cst_64 = arith.constant 5.000000e-01 : f32
    %251 = vector.broadcast %cst_64 : f32 to vector<2x128xf32>
    %252 = arith.mulf %251, %250 : vector<2x128xf32>
    %253 = math.tanh %252 : vector<2x128xf32>
    %cst_65 = arith.constant 1.000000e+00 : f32
    %254 = vector.broadcast %cst_65 : f32 to vector<2x128xf32>
    %255 = arith.addf %253, %254 : vector<2x128xf32>
    %cst_66 = arith.constant 5.000000e-01 : f32
    %256 = vector.broadcast %cst_66 : f32 to vector<2x128xf32>
    %257 = arith.mulf %256, %255 : vector<2x128xf32>
    %258 = vector.extract_strided_slice %257 {offsets = [0, 0], sizes = [2, 32], strides = [1, 1]} : vector<2x128xf32> to vector<2x32xf32>
    %259 = vector.extract_strided_slice %257 {offsets = [0, 32], sizes = [2, 32], strides = [1, 1]} : vector<2x128xf32> to vector<2x32xf32>
    %260 = vector.extract_strided_slice %257 {offsets = [0, 96], sizes = [2, 32], strides = [1, 1]} : vector<2x128xf32> to vector<2x32xf32>
    %261 = vector.extract_strided_slice %250 {offsets = [0, 64], sizes = [2, 32], strides = [1, 1]} : vector<2x128xf32> to vector<2x32xf32>
    %262 = math.tanh %261 : vector<2x32xf32>
    %263 = arith.mulf %259, %245 : vector<2x32xf32>
    %264 = arith.mulf %258, %262 : vector<2x32xf32>
    %265 = arith.addf %263, %264 : vector<2x32xf32>
    %266 = math.tanh %265 : vector<2x32xf32>
    %267 = arith.mulf %260, %266 : vector<2x32xf32>
    %268 = vector.extract_strided_slice %185 {offsets = [8, 0], sizes = [2, 128], strides = [1, 1]} : vector<16x128xf32> to vector<2x128xf32>
    %cst_67 = arith.constant dense<0.000000e+00> : vector<2x128xf32>
    %269 = tpu.matmul %267, %181, %cst_67 {dimension_numbers = #tpu.dot_dimension_numbers<[1], [0], [0], [1], [0, 0, 1, 1], [], []>} : vector<2x32xf32>, vector<32x128xf32>, vector<2x128xf32> -> vector<2x128xf32>
    %270 = arith.addf %268, %269 : vector<2x128xf32>
    %cst_68 = arith.constant 5.000000e-01 : f32
    %271 = vector.broadcast %cst_68 : f32 to vector<2x128xf32>
    %272 = arith.mulf %271, %270 : vector<2x128xf32>
    %273 = math.tanh %272 : vector<2x128xf32>
    %cst_69 = arith.constant 1.000000e+00 : f32
    %274 = vector.broadcast %cst_69 : f32 to vector<2x128xf32>
    %275 = arith.addf %273, %274 : vector<2x128xf32>
    %cst_70 = arith.constant 5.000000e-01 : f32
    %276 = vector.broadcast %cst_70 : f32 to vector<2x128xf32>
    %277 = arith.mulf %276, %275 : vector<2x128xf32>
    %278 = vector.extract_strided_slice %277 {offsets = [0, 0], sizes = [2, 32], strides = [1, 1]} : vector<2x128xf32> to vector<2x32xf32>
    %279 = vector.extract_strided_slice %277 {offsets = [0, 32], sizes = [2, 32], strides = [1, 1]} : vector<2x128xf32> to vector<2x32xf32>
    %280 = vector.extract_strided_slice %277 {offsets = [0, 96], sizes = [2, 32], strides = [1, 1]} : vector<2x128xf32> to vector<2x32xf32>
    %281 = vector.extract_strided_slice %270 {offsets = [0, 64], sizes = [2, 32], strides = [1, 1]} : vector<2x128xf32> to vector<2x32xf32>
    %282 = math.tanh %281 : vector<2x32xf32>
    %283 = arith.mulf %279, %265 : vector<2x32xf32>
    %284 = arith.mulf %278, %282 : vector<2x32xf32>
    %285 = arith.addf %283, %284 : vector<2x32xf32>
    %286 = math.tanh %285 : vector<2x32xf32>
    %287 = arith.mulf %280, %286 : vector<2x32xf32>
    %288 = vector.extract_strided_slice %185 {offsets = [10, 0], sizes = [2, 128], strides = [1, 1]} : vector<16x128xf32> to vector<2x128xf32>
    %cst_71 = arith.constant dense<0.000000e+00> : vector<2x128xf32>
    %289 = tpu.matmul %287, %181, %cst_71 {dimension_numbers = #tpu.dot_dimension_numbers<[1], [0], [0], [1], [0, 0, 1, 1], [], []>} : vector<2x32xf32>, vector<32x128xf32>, vector<2x128xf32> -> vector<2x128xf32>
    %290 = arith.addf %288, %289 : vector<2x128xf32>
    %cst_72 = arith.constant 5.000000e-01 : f32
    %291 = vector.broadcast %cst_72 : f32 to vector<2x128xf32>
    %292 = arith.mulf %291, %290 : vector<2x128xf32>
    %293 = math.tanh %292 : vector<2x128xf32>
    %cst_73 = arith.constant 1.000000e+00 : f32
    %294 = vector.broadcast %cst_73 : f32 to vector<2x128xf32>
    %295 = arith.addf %293, %294 : vector<2x128xf32>
    %cst_74 = arith.constant 5.000000e-01 : f32
    %296 = vector.broadcast %cst_74 : f32 to vector<2x128xf32>
    %297 = arith.mulf %296, %295 : vector<2x128xf32>
    %298 = vector.extract_strided_slice %297 {offsets = [0, 0], sizes = [2, 32], strides = [1, 1]} : vector<2x128xf32> to vector<2x32xf32>
    %299 = vector.extract_strided_slice %297 {offsets = [0, 32], sizes = [2, 32], strides = [1, 1]} : vector<2x128xf32> to vector<2x32xf32>
    %300 = vector.extract_strided_slice %297 {offsets = [0, 96], sizes = [2, 32], strides = [1, 1]} : vector<2x128xf32> to vector<2x32xf32>
    %301 = vector.extract_strided_slice %290 {offsets = [0, 64], sizes = [2, 32], strides = [1, 1]} : vector<2x128xf32> to vector<2x32xf32>
    %302 = math.tanh %301 : vector<2x32xf32>
    %303 = arith.mulf %299, %285 : vector<2x32xf32>
    %304 = arith.mulf %298, %302 : vector<2x32xf32>
    %305 = arith.addf %303, %304 : vector<2x32xf32>
    %306 = math.tanh %305 : vector<2x32xf32>
    %307 = arith.mulf %300, %306 : vector<2x32xf32>
    %308 = vector.extract_strided_slice %185 {offsets = [12, 0], sizes = [2, 128], strides = [1, 1]} : vector<16x128xf32> to vector<2x128xf32>
    %cst_75 = arith.constant dense<0.000000e+00> : vector<2x128xf32>
    %309 = tpu.matmul %307, %181, %cst_75 {dimension_numbers = #tpu.dot_dimension_numbers<[1], [0], [0], [1], [0, 0, 1, 1], [], []>} : vector<2x32xf32>, vector<32x128xf32>, vector<2x128xf32> -> vector<2x128xf32>
    %310 = arith.addf %308, %309 : vector<2x128xf32>
    %cst_76 = arith.constant 5.000000e-01 : f32
    %311 = vector.broadcast %cst_76 : f32 to vector<2x128xf32>
    %312 = arith.mulf %311, %310 : vector<2x128xf32>
    %313 = math.tanh %312 : vector<2x128xf32>
    %cst_77 = arith.constant 1.000000e+00 : f32
    %314 = vector.broadcast %cst_77 : f32 to vector<2x128xf32>
    %315 = arith.addf %313, %314 : vector<2x128xf32>
    %cst_78 = arith.constant 5.000000e-01 : f32
    %316 = vector.broadcast %cst_78 : f32 to vector<2x128xf32>
    %317 = arith.mulf %316, %315 : vector<2x128xf32>
    %318 = vector.extract_strided_slice %317 {offsets = [0, 0], sizes = [2, 32], strides = [1, 1]} : vector<2x128xf32> to vector<2x32xf32>
    %319 = vector.extract_strided_slice %317 {offsets = [0, 32], sizes = [2, 32], strides = [1, 1]} : vector<2x128xf32> to vector<2x32xf32>
    %320 = vector.extract_strided_slice %317 {offsets = [0, 96], sizes = [2, 32], strides = [1, 1]} : vector<2x128xf32> to vector<2x32xf32>
    %321 = vector.extract_strided_slice %310 {offsets = [0, 64], sizes = [2, 32], strides = [1, 1]} : vector<2x128xf32> to vector<2x32xf32>
    %322 = math.tanh %321 : vector<2x32xf32>
    %323 = arith.mulf %319, %305 : vector<2x32xf32>
    %324 = arith.mulf %318, %322 : vector<2x32xf32>
    %325 = arith.addf %323, %324 : vector<2x32xf32>
    %326 = math.tanh %325 : vector<2x32xf32>
    %327 = arith.mulf %320, %326 : vector<2x32xf32>
    %328 = vector.extract_strided_slice %185 {offsets = [14, 0], sizes = [2, 128], strides = [1, 1]} : vector<16x128xf32> to vector<2x128xf32>
    %cst_79 = arith.constant dense<0.000000e+00> : vector<2x128xf32>
    %329 = tpu.matmul %327, %181, %cst_79 {dimension_numbers = #tpu.dot_dimension_numbers<[1], [0], [0], [1], [0, 0, 1, 1], [], []>} : vector<2x32xf32>, vector<32x128xf32>, vector<2x128xf32> -> vector<2x128xf32>
    %330 = arith.addf %328, %329 : vector<2x128xf32>
    %cst_80 = arith.constant 5.000000e-01 : f32
    %331 = vector.broadcast %cst_80 : f32 to vector<2x128xf32>
    %332 = arith.mulf %331, %330 : vector<2x128xf32>
    %333 = math.tanh %332 : vector<2x128xf32>
    %cst_81 = arith.constant 1.000000e+00 : f32
    %334 = vector.broadcast %cst_81 : f32 to vector<2x128xf32>
    %335 = arith.addf %333, %334 : vector<2x128xf32>
    %cst_82 = arith.constant 5.000000e-01 : f32
    %336 = vector.broadcast %cst_82 : f32 to vector<2x128xf32>
    %337 = arith.mulf %336, %335 : vector<2x128xf32>
    %338 = vector.extract_strided_slice %337 {offsets = [0, 0], sizes = [2, 32], strides = [1, 1]} : vector<2x128xf32> to vector<2x32xf32>
    %339 = vector.extract_strided_slice %337 {offsets = [0, 32], sizes = [2, 32], strides = [1, 1]} : vector<2x128xf32> to vector<2x32xf32>
    %340 = vector.extract_strided_slice %337 {offsets = [0, 96], sizes = [2, 32], strides = [1, 1]} : vector<2x128xf32> to vector<2x32xf32>
    %341 = vector.extract_strided_slice %330 {offsets = [0, 64], sizes = [2, 32], strides = [1, 1]} : vector<2x128xf32> to vector<2x32xf32>
    %342 = math.tanh %341 : vector<2x32xf32>
    %343 = arith.mulf %339, %325 : vector<2x32xf32>
    %344 = arith.mulf %338, %342 : vector<2x32xf32>
    %345 = arith.addf %343, %344 : vector<2x32xf32>
    %346 = math.tanh %345 : vector<2x32xf32>
    %347 = arith.mulf %340, %346 : vector<2x32xf32>
    %c0_83 = arith.constant 0 : index
    %c0_84 = arith.constant 0 : index
    %348 = vector.load %arg7[%c0_83, %c0_84] : memref<32x4xf32, #tpu.memory_space<vmem>>, vector<32x4xf32>
    %cst_85 = arith.constant dense<0.000000e+00> : vector<2x4xf32>
    %349 = tpu.matmul %347, %348, %cst_85 {dimension_numbers = #tpu.dot_dimension_numbers<[1], [0], [0], [1], [0, 0, 1, 1], [], []>} : vector<2x32xf32>, vector<32x4xf32>, vector<2x4xf32> -> vector<2x4xf32>
    %c0_86 = arith.constant 0 : index
    %c0_87 = arith.constant 0 : index
    %350 = vector.load %arg8[%c0_86, %c0_87] : memref<1x4xf32, #tpu.memory_space<vmem>>, vector<1x4xf32>
    %351 = vector.broadcast %350 : vector<1x4xf32> to vector<2x4xf32>
    %352 = arith.addf %349, %351 : vector<2x4xf32>
    %c0_88 = arith.constant 0 : index
    %c0_89 = arith.constant 0 : index
    %353 = vector.load %arg9[%c0_88, %c0_89] : memref<2x4xf32, #tpu.memory_space<vmem>>, vector<2x4xf32>
    tpu.vector_store %arg9[%c0_88, %c0_89], %352 {strides = array<i32>} : memref<2x4xf32, #tpu.memory_space<vmem>>, vector<2x4xf32>,
    return
  }
}

</mosaic_0001>

<llo_original>
// kernel: lstm_classifier_forward.1
$region0: #{lstm_classifier_forward.1}
  #allocation0 [shape = 'u32[]', space=smem, size = 0x4, offset = 0x4, fixed_abs, tag = 'smem constant byte address 0x4 - core index']
  #allocation1 [shape = 'u32[144,128]{1,0:T(1,128)}', space=vmem, size = 0x12000, scoped, tag = 'internal scratch']
  %s0 = inlined_call_operand.hbm [shape: f32[2,8,16], index: 0, kind: input, shape index: {}]
  %s1 = inlined_call_operand.hbm [shape: f32[16,128], index: 1, kind: input, shape index: {}]
  %s2 = inlined_call_operand.vmem [shape: f32[32,128], index: 2, kind: input, shape index: {}]
  %s3 = inlined_call_operand.vmem [shape: f32[1,128], index: 3, kind: input, shape index: {}]
  %s4 = inlined_call_operand.vmem [shape: f32[32,128], index: 4, kind: input, shape index: {}]
  %s5 = inlined_call_operand.hbm [shape: f32[32,128], index: 5, kind: input, shape index: {}]
  %s6 = inlined_call_operand.vmem [shape: f32[1,128], index: 6, kind: input, shape index: {}]
  %s7 = inlined_call_operand.vmem [shape: f32[32,4], index: 7, kind: input, shape index: {}]
  %s8 = inlined_call_operand.hbm [shape: f32[1,4], index: 8, kind: input, shape index: {}]
  %s9 = inlined_call_operand.hbm [shape: f32[2,4], index: 9, kind: output, shape index: {}]
  %s10 = sld [smem:[#allocation0]]
  $region62: #{lstm_classifier_forward.1} parent=0
    _
  %s12 = ssub.s32 1, %s10
  %s13 = scalar_select 0, %s12, %s10
  $region1: #{lstm_classifier_forward.1} parent=0
    #allocation2 [shape = 'u8[8192]{0}', space=vmem, size = 0x2000, scoped, tag = 'input window, operand 0, single buffered']
    #allocation3 [shape = 's32[1]{0}', space=sflag, size = 0x4, scoped, tag = 'scoped memory for lstm_classifier_forward.1']
    #allocation4 [shape = 's32[1]{0}', space=sflag, size = 0x4, scoped, tag = 'scoped memory for lstm_classifier_forward.1']
    #allocation5 [shape = 'u8[8192]{0}', space=vmem, size = 0x2000, scoped, tag = 'input window, operand 1, single buffered']
    #allocation6 [shape = 's32[1]{0}', space=sflag, size = 0x4, scoped, tag = 'scoped memory for lstm_classifier_forward.1']
    #allocation7 [shape = 'u8[16384]{0}', space=vmem, size = 0x4000, scoped, tag = 'input window, operand 5, single buffered']
    #allocation8 [shape = 'u8[512]{0}', space=vmem, size = 0x400, scoped, tag = 'input window, operand 8, single buffered']
    #allocation9 [shape = 's32[1]{0}', space=sflag, size = 0x4, scoped, tag = 'scoped memory for lstm_classifier_forward.1']
    #allocation10 [shape = 'u8[1024]{0}', space=vmem, size = 0x400, scoped, tag = 'output window, operand 0, single buffered']
    %14 = vsyncpa [#allocation3], 0
    %15 = vsyncpa [#allocation6], 0
    %16 = vsyncpa [#allocation9], 0
    %17 = vsyncpa [#allocation4], 0
    // Predicated region
    $region2: #{lstm_classifier_forward.1} parent=1 // pred_check
      _
    $region3: #{lstm_classifier_forward.1} parent=1 // pred_check_branch
      %19 = sbr.rel (0) target = $region5
    $region4: #{lstm_classifier_forward.1} parent=1 // pred_region
      %s21 = ssub.s32 256, 256
      %22 = vsyncadd [#allocation3], %s21
      %s23 = sshll.u32 [#allocation2], 4
      %s24 = int_to_ptr.vmem [resolvable:$true] %s23
      %29 = dma.hbm_to_vmem [thread:$0]  %s0, 256, %s24, [#allocation3], 128, 128, 8
    $region5: #{lstm_classifier_forward.1} parent=1 // pred_fallthru
      _
    // Predicated region
    $region6: #{lstm_classifier_forward.1} parent=1 // pred_check
      _
    $region7: #{lstm_classifier_forward.1} parent=1 // pred_check_branch
      %31 = sbr.rel (0) target = $region9
    $region8: #{lstm_classifier_forward.1} parent=1 // pred_region
      %s33 = ssub.s32 256, 256
      %34 = vsyncadd [#allocation6], %s33
      %s35 = sshll.u32 [#allocation5], 4
      %s36 = int_to_ptr.vmem [resolvable:$true] %s35
      %41 = dma.hbm_to_vmem [thread:$0]  %s1, 256, %s36, [#allocation6], 128, 128, 8
    $region9: #{lstm_classifier_forward.1} parent=1 // pred_fallthru
      _
    // Predicated region
    $region10: #{lstm_classifier_forward.1} parent=1 // pred_check
      _
    $region11: #{lstm_classifier_forward.1} parent=1 // pred_check_branch
      %43 = sbr.rel (0) target = $region13
    $region12: #{lstm_classifier_forward.1} parent=1 // pred_region
      _
    $region13: #{lstm_classifier_forward.1} parent=1 // pred_fallthru
      _
    // Predicated region
    $region14: #{lstm_classifier_forward.1} parent=1 // pred_check
      _
    $region15: #{lstm_classifier_forward.1} parent=1 // pred_check_branch
      %45 = sbr.rel (0) target = $region17
    $region16: #{lstm_classifier_forward.1} parent=1 // pred_region
      _
    $region17: #{lstm_classifier_forward.1} parent=1 // pred_fallthru
      _
    // Predicated region
    $region18: #{lstm_classifier_forward.1} parent=1 // pred_check
      _
    $region19: #{lstm_classifier_forward.1} parent=1 // pred_check_branch
      %47 = sbr.rel (0) target = $region21
    $region20: #{lstm_classifier_forward.1} parent=1 // pred_region
      _
    $region21: #{lstm_classifier_forward.1} parent=1 // pred_fallthru
      _
    // Predicated region
    $region22: #{lstm_classifier_forward.1} parent=1 // pred_check
      _
    $region23: #{lstm_classifier_forward.1} parent=1 // pred_check_branch
      %49 = sbr.rel (0) target = $region25
    $region24: #{lstm_classifier_forward.1} parent=1 // pred_region
      %s51 = ssub.s32 512, 512
      %52 = vsyncadd [#allocation6], %s51
      %s53 = sshll.u32 [#allocation7], 4
      %s54 = int_to_ptr.vmem [resolvable:$true] %s53
      %59 = dma.hbm_to_vmem [thread:$0]  %s5, 512, %s54, [#allocation6], 128, 128, 8
    $region25: #{lstm_classifier_forward.1} parent=1 // pred_fallthru
      _
    // Predicated region
    $region26: #{lstm_classifier_forward.1} parent=1 // pred_check
      _
    $region27: #{lstm_classifier_forward.1} parent=1 // pred_check_branch
      %61 = sbr.rel (0) target = $region29
    $region28: #{lstm_classifier_forward.1} parent=1 // pred_region
      _
    $region29: #{lstm_classifier_forward.1} parent=1 // pred_fallthru
      _
    // Predicated region
    $region30: #{lstm_classifier_forward.1} parent=1 // pred_check
      _
    $region31: #{lstm_classifier_forward.1} parent=1 // pred_check_branch
      %63 = sbr.rel (0) target = $region33
    $region32: #{lstm_classifier_forward.1} parent=1 // pred_region
      _
    $region33: #{lstm_classifier_forward.1} parent=1 // pred_fallthru
      _
    // Predicated region
    $region34: #{lstm_classifier_forward.1} parent=1 // pred_check
      _
    $region35: #{lstm_classifier_forward.1} parent=1 // pred_check_branch
      %65 = sbr.rel (0) target = $region37
    $region36: #{lstm_classifier_forward.1} parent=1 // pred_region
      %s67 = ssub.s32 16, 16
      %68 = vsyncadd [#allocation9], %s67
      %s70 = sshll.u32 [#allocation8], 4
      %s71 = int_to_ptr.vmem [resolvable:$true] %s70
      %73 = dma.hbm_to_vmem [thread:$0]  %s8, 16, %s71, [#allocation9]
    $region37: #{lstm_classifier_forward.1} parent=1 // pred_fallthru
      _
    // Predicated region
    $region38: #{lstm_classifier_forward.1} parent=1 // pred_check
      _
    $region39: #{lstm_classifier_forward.1} parent=1 // pred_check_branch
      %75 = sbr.rel (0) target = $region41
    $region40: #{lstm_classifier_forward.1} parent=1 // pred_region
      %76 = dma.done [#allocation3], 256
    $region41: #{lstm_classifier_forward.1} parent=1 // pred_fallthru
      _
    // Predicated region
    $region42: #{lstm_classifier_forward.1} parent=1 // pred_check
      _
    $region43: #{lstm_classifier_forward.1} parent=1 // pred_check_branch
      %78 = sbr.rel (0) target = $region45
    $region44: #{lstm_classifier_forward.1} parent=1 // pred_region
      %79 = dma.done [#allocation6], 256
    $region45: #{lstm_classifier_forward.1} parent=1 // pred_fallthru
      _
    // Predicated region
    $region46: #{lstm_classifier_forward.1} parent=1 // pred_check
      _
    $region47: #{lstm_classifier_forward.1} parent=1 // pred_check_branch
      %81 = sbr.rel (0) target = $region49
    $region48: #{lstm_classifier_forward.1} parent=1 // pred_region
      %82 = dma.done [#allocation6], 512
    $region49: #{lstm_classifier_forward.1} parent=1 // pred_fallthru
      _
    // Predicated region
    $region50: #{lstm_classifier_forward.1} parent=1 // pred_check
      _
    $region51: #{lstm_classifier_forward.1} parent=1 // pred_check_branch
      %84 = sbr.rel (0) target = $region53
    $region52: #{lstm_classifier_forward.1} parent=1 // pred_region
      %85 = dma.done [#allocation9], 16
    $region53: #{lstm_classifier_forward.1} parent=1 // pred_fallthru
      _
    %v86 = vld [vmem:[#allocation2] sm:$0xff]
    %v87 = vld [vmem:[#allocation2 + $0x8] sm:$0xff]
    %v88 = vld [vmem:[#allocation5] sm:$0xff]
    %v89 = vld [vmem:[#allocation5 + $0x8] sm:$0xff]
    %v90 = vld [vmem:[%s2] sm:$0xff]
    %v91 = vld [vmem:[%s2 + $0x8] sm:$0xff]
    %v92 = vld [vmem:[%s2 + $0x10] sm:$0xff]
    %v93 = vld [vmem:[%s2 + $0x18] sm:$0xff]
    %v94 = vld [vmem:[%s3] sm:$0x1]
    %v96 = vlaneseq
    %v97 = vshrl.u32 %v96, 7
    %v98 = vsub.s32 0, %v97
    %v99 = vrot.slane %v94, %v98
    %vm101 = vcmask 130048
    %v103 = vsel %vm101, %v86, 0
    %v106 = vsel %vm101, %v87, 0
    %108 = vmatprep.subr.mxu0 0.0
    %109 = vmatpush1.msra.mxu0 %v88
    %110 = vmatprep.subr.mxu0 0.0
    %111 = vmatpush1.msra.mxu0 %v89
    %112 = vmatprep.subr.mxu0 0.0
    %113 = vmatpush1.msra.mxu0 0.0
    %114 = vmatprep.subr.mxu0 0.0
    %115 = vmatpush1.msra.mxu0 0.0
    %116 = vmatprep.subr.mxu0 0.0
    %117 = vmatpush1.msra.mxu0 0.0
    %118 = vmatprep.subr.mxu0 0.0
    %119 = vmatpush1.msra.mxu0 0.0
    %120 = vmatprep.subr.mxu0 0.0
    %121 = vmatpush1.msra.mxu0 0.0
    %122 = vmatprep.subr.mxu0 0.0
    %123 = vmatpush1.msra.mxu0 0.0
    %124 = vmatprep.subr.mxu0 0.0
    %125 = vmatpush1.msra.mxu0 0.0
    %126 = vmatprep.subr.mxu0 0.0
    %127 = vmatpush1.msra.mxu0 0.0
    %128 = vmatprep.subr.mxu0 0.0
    %129 = vmatpush1.msra.mxu0 0.0
    %130 = vmatprep.subr.mxu0 0.0
    %131 = vmatpush1.msra.mxu0 0.0
    %132 = vmatprep.subr.mxu0 0.0
    %133 = vmatpush1.msra.mxu0 0.0
    %134 = vmatprep.subr.mxu0 0.0
    %135 = vmatpush1.msra.mxu0 0.0
    %136 = vmatprep.subr.mxu0 0.0
    %137 = vmatpush1.msra.mxu0 0.0
    %138 = vmatprep.subr.mxu0 0.0
    %139 = vmatpush1.msra.mxu0 0.0
    %140 = vmatprep.subr.mxu0 0.0
    %141 = vmatpush1.msra.mxu0 0.0
    %142 = vmatprep.subr.mxu0 0.0
    %143 = vmatpush1.msra.mxu0 0.0
    %144 = vmatprep.subr.mxu0 0.0
    %145 = vmatpush1.msra.mxu0 0.0
    %146 = vmatprep.subr.mxu0 0.0
    %147 = vmatpush1.msra.mxu0 0.0
    %148 = vmatprep.subr.mxu0 0.0
    %149 = vmatpush1.msra.mxu0 0.0
    %150 = vmatprep.subr.mxu0 0.0
    %151 = vmatpush1.msra.mxu0 0.0
    %152 = vmatprep.subr.mxu0 0.0
    %153 = vmatpush1.msra.mxu0 0.0
    %154 = vmatprep.subr.mxu0 0.0
    %155 = vmatpush1.msra.mxu0 0.0
    %156 = vmatprep.subr.mxu0 0.0
    %157 = vmatpush1.msra.mxu0 0.0
    %158 = vmatprep.subr.mxu0 0.0
    %159 = vmatpush1.msra.mxu0 0.0
    %160 = vmatprep.subr.mxu0 0.0
    %161 = vmatpush1.msra.mxu0 0.0
    %162 = vmatprep.subr.mxu0 0.0
    %163 = vmatpush1.msra.mxu0 0.0
    %164 = vmatprep.subr.mxu0 0.0
    %165 = vmatpush1.msra.mxu0 0.0
    %166 = vmatprep.subr.mxu0 0.0
    %167 = vmatpush1.msra.mxu0 0.0
    %168 = vmatprep.subr.mxu0 0.0
    %169 = vmatpush1.msra.mxu0 0.0
    %170 = vmatprep.subr.mxu0 0.0
    %171 = vmatpush1.msra.mxu0 0.0
    %172 = vmatprep.mubr.f32.mxu0 0.0
    %173 = vmatmul.mubr.f32.gmra.mrb[0].mxu0 %v103
    %v174 = vpop.f32.mrb[0].mxu0
    %v175 = vadd.f32 %v99, %v174
    %v176 = vpop.f32.mrb[0].mxu0
    %177 = vmatprep.mubr.f32.mxu0 0.0
    %178 = vmatmul.mubr.f32.gmra.mrb[0].mxu0 %v106
    %v179 = vpop.f32.mrb[0].mxu0
    %v180 = vadd.f32 %v99, %v179
    %v181 = vpop.f32.mrb[0].mxu0
    %182 = vdwg.mxu0
    %vm183 = vcmask 261120
    %v185 = vsel %vm183, 0.0, 0
    %187 = vmatprep.subr.mxu0 0.0
    %188 = vmatpush1.msra.mxu0 %v90
    %189 = vmatprep.subr.mxu0 0.0
    %190 = vmatpush1.msra.mxu0 %v91
    %191 = vmatprep.subr.mxu0 0.0
    %192 = vmatpush1.msra.mxu0 %v92
    %193 = vmatprep.subr.mxu0 0.0
    %194 = vmatpush1.msra.mxu0 %v93
    %195 = vmatprep.subr.mxu0 0.0
    %196 = vmatpush1.msra.mxu0 0.0
    %197 = vmatprep.subr.mxu0 0.0
    %198 = vmatpush1.msra.mxu0 0.0
    %199 = vmatprep.subr.mxu0 0.0
    %200 = vmatpush1.msra.mxu0 0.0
    %201 = vmatprep.subr.mxu0 0.0
    %202 = vmatpush1.msra.mxu0 0.0
    %203 = vmatprep.subr.mxu0 0.0
    %204 = vmatpush1.msra.mxu0 0.0
    %205 = vmatprep.subr.mxu0 0.0
    %206 = vmatpush1.msra.mxu0 0.0
    %207 = vmatprep.subr.mxu0 0.0
    %208 = vmatpush1.msra.mxu0 0.0
    %209 = vmatprep.subr.mxu0 0.0
    %210 = vmatpush1.msra.mxu0 0.0
    %211 = vmatprep.subr.mxu0 0.0
    %212 = vmatpush1.msra.mxu0 0.0
    %213 = vmatprep.subr.mxu0 0.0
    %214 = vmatpush1.msra.mxu0 0.0
    %215 = vmatprep.subr.mxu0 0.0
    %216 = vmatpush1.msra.mxu0 0.0
    %217 = vmatprep.subr.mxu0 0.0
    %218 = vmatpush1.msra.mxu0 0.0
    %219 = vmatprep.subr.mxu0 0.0
    %220 = vmatpush1.msra.mxu0 0.0
    %221 = vmatprep.subr.mxu0 0.0
    %222 = vmatpush1.msra.mxu0 0.0
    %223 = vmatprep.subr.mxu0 0.0
    %224 = vmatpush1.msra.mxu0 0.0
    %225 = vmatprep.subr.mxu0 0.0
    %226 = vmatpush1.msra.mxu0 0.0
    %227 = vmatprep.subr.mxu0 0.0
    %228 = vmatpush1.msra.mxu0 0.0
    %229 = vmatprep.subr.mxu0 0.0
    %230 = vmatpush1.msra.mxu0 0.0
    %231 = vmatprep.subr.mxu0 0.0
    %232 = vmatpush1.msra.mxu0 0.0
    %233 = vmatprep.subr.mxu0 0.0
    %234 = vmatpush1.msra.mxu0 0.0
    %235 = vmatprep.subr.mxu0 0.0
    %236 = vmatpush1.msra.mxu0 0.0
    %237 = vmatprep.subr.mxu0 0.0
    %238 = vmatpush1.msra.mxu0 0.0
    %239 = vmatprep.subr.mxu0 0.0
    %240 = vmatpush1.msra.mxu0 0.0
    %241 = vmatprep.subr.mxu0 0.0
    %242 = vmatpush1.msra.mxu0 0.0
    %243 = vmatprep.subr.mxu0 0.0
    %244 = vmatpush1.msra.mxu0 0.0
    %245 = vmatprep.subr.mxu0 0.0
    %246 = vmatpush1.msra.mxu0 0.0
    %247 = vmatprep.subr.mxu0 0.0
    %248 = vmatpush1.msra.mxu0 0.0
    %249 = vmatprep.subr.mxu0 0.0
    %250 = vmatpush1.msra.mxu0 0.0
    %251 = vmatprep.mubr.f32.mxu0 0.0
    %252 = vmatmul.mubr.f32.gmra.mrb[0].mxu0 %v185
    %v253 = vpop.f32.mrb[0].mxu0
    %v254 = vadd.f32 0.0, %v253
    %v255 = vpop.f32.mrb[0].mxu0
    %256 = vdwg.mxu0
    %v258 = vrot.slane %v254, 1
    %v261 = vadd.f32 %v175, %v254
    %v262 = vadd.f32 %v180, %v258
    %v263 = vmul.f32 %v261, 0.5
    %v264 = vmul.f32 %v262, 0.5
    %v265 = vtanh.pop %v263
    %v266 = vtanh.pop %v264
    %v267 = vadd.f32 %v265, 1.0
    %v268 = vadd.f32 %v266, 1.0
    %v269 = vmul.f32 %v267, 0.5
    %v270 = vmul.f32 %v268, 0.5
    %v271 = vtanh.pop %v261
    %v272 = vtanh.pop %v262
    %v273 = vmul.f32 %v269, 0.0
    %v274 = vmul.f32 %v270, 0.0
    %277 = vrot.lane.b32.xlu0 %v271, 64
    %v278 = vpop.permute.xlu0 %277
    %279 = vrot.lane.b32.xlu0 %v272, 64
    %v280 = vpop.permute.xlu0 %279
    %v283 = vmul.f32 %v269, %v278
    %v284 = vmul.f32 %v270, %v280
    %287 = vrot.lane.b32.xlu0 %v283, 32
    %v288 = vpop.permute.xlu0 %287
    %289 = vrot.lane.b32.xlu0 %v284, 32
    %v290 = vpop.permute.xlu0 %289
    %v293 = vadd.f32 %v273, %v288
    %v294 = vadd.f32 %v274, %v290
    %v295 = vtanh.pop %v293
    %v296 = vtanh.pop %v294
    %299 = vrot.lane.b32.xlu0 %v295, 64
    %v300 = vpop.permute.xlu0 %299
    %301 = vrot.lane.b32.xlu0 %v296, 64
    %v302 = vpop.permute.xlu0 %301
    %v305 = vmul.f32 %v269, %v300
    %v306 = vmul.f32 %v270, %v302
    %v309 = vrot.slane %v306, 7
    %vm310 = vcmask 1041409
    %v311 = vsel %vm310, %v309, %v305
    %312 = vrot.lane.b32.xlu0 %v311, 32
    %v313 = vpop.permute.xlu0 %312
    %v314 = vsel %vm183, %v313, 0
    %316 = vmatprep.subr.mxu0 0.0
    %317 = vmatpush1.msra.mxu0 %v90
    %318 = vmatprep.subr.mxu0 0.0
    %319 = vmatpush1.msra.mxu0 %v91
    %320 = vmatprep.subr.mxu0 0.0
    %321 = vmatpush1.msra.mxu0 %v92
    %322 = vmatprep.subr.mxu0 0.0
    %323 = vmatpush1.msra.mxu0 %v93
    %324 = vmatprep.subr.mxu0 0.0
    %325 = vmatpush1.msra.mxu0 0.0
    %326 = vmatprep.subr.mxu0 0.0
    %327 = vmatpush1.msra.mxu0 0.0
    %328 = vmatprep.subr.mxu0 0.0
    %329 = vmatpush1.msra.mxu0 0.0
    %330 = vmatprep.subr.mxu0 0.0
    %331 = vmatpush1.msra.mxu0 0.0
    %332 = vmatprep.subr.mxu0 0.0
    %333 = vmatpush1.msra.mxu0 0.0
    %334 = vmatprep.subr.mxu0 0.0
    %335 = vmatpush1.msra.mxu0 0.0
    %336 = vmatprep.subr.mxu0 0.0
    %337 = vmatpush1.msra.mxu0 0.0
    %338 = vmatprep.subr.mxu0 0.0
    %339 = vmatpush1.msra.mxu0 0.0
    %340 = vmatprep.subr.mxu0 0.0
    %341 = vmatpush1.msra.mxu0 0.0
    %342 = vmatprep.subr.mxu0 0.0
    %343 = vmatpush1.msra.mxu0 0.0
    %344 = vmatprep.subr.mxu0 0.0
    %345 = vmatpush1.msra.mxu0 0.0
    %346 = vmatprep.subr.mxu0 0.0
    %347 = vmatpush1.msra.mxu0 0.0
    %348 = vmatprep.subr.mxu0 0.0
    %349 = vmatpush1.msra.mxu0 0.0
    %350 = vmatprep.subr.mxu0 0.0
    %351 = vmatpush1.msra.mxu0 0.0
    %352 = vmatprep.subr.mxu0 0.0
    %353 = vmatpush1.msra.mxu0 0.0
    %354 = vmatprep.subr.mxu0 0.0
    %355 = vmatpush1.msra.mxu0 0.0
    %356 = vmatprep.subr.mxu0 0.0
    %357 = vmatpush1.msra.mxu0 0.0
    %358 = vmatprep.subr.mxu0 0.0
    %359 = vmatpush1.msra.mxu0 0.0
    %360 = vmatprep.subr.mxu0 0.0
    %361 = vmatpush1.msra.mxu0 0.0
    %362 = vmatprep.subr.mxu0 0.0
    %363 = vmatpush1.msra.mxu0 0.0
    %364 = vmatprep.subr.mxu0 0.0
    %365 = vmatpush1.msra.mxu0 0.0
    %366 = vmatprep.subr.mxu0 0.0
    %367 = vmatpush1.msra.mxu0 0.0
    %368 = vmatprep.subr.mxu0 0.0
    %369 = vmatpush1.msra.mxu0 0.0
    %370 = vmatprep.subr.mxu0 0.0
    %371 = vmatpush1.msra.mxu0 0.0
    %372 = vmatprep.subr.mxu0 0.0
    %373 = vmatpush1.msra.mxu0 0.0
    %374 = vmatprep.subr.mxu0 0.0
    %375 = vmatpush1.msra.mxu0 0.0
    %376 = vmatprep.subr.mxu0 0.0
    %377 = vmatpush1.msra.mxu0 0.0
    %378 = vmatprep.subr.mxu0 0.0
    %379 = vmatpush1.msra.mxu0 0.0
    %380 = vmatprep.mubr.f32.mxu0 0.0
    %381 = vmatmul.mubr.f32.gmra.mrb[0].mxu0 %v314
    %v382 = vpop.f32.mrb[0].mxu0
    %v383 = vadd.f32 0.0, %v382
    %v384 = vpop.f32.mrb[0].mxu0
    %385 = vdwg.mxu0
    %v387 = vrot.slane %v383, 7
    %v390 = vadd.f32 %v175, %v387
    %v391 = vadd.f32 %v180, %v383
    %v392 = vmul.f32 %v390, 0.5
    %v393 = vmul.f32 %v391, 0.5
    %v394 = vtanh.pop %v392
    %v395 = vtanh.pop %v393
    %v396 = vadd.f32 %v394, 1.0
    %v397 = vadd.f32 %v395, 1.0
    %v398 = vmul.f32 %v396, 0.5
    %v399 = vmul.f32 %v397, 0.5
    %v400 = vtanh.pop %v390
    %v401 = vtanh.pop %v391
    %v404 = vrot.slane %v293, 7
    %v405 = vrot.slane %v294, 7
    %v408 = vmul.f32 %v398, %v404
    %v409 = vmul.f32 %v399, %v405
    %412 = vrot.lane.b32.xlu0 %v400, 64
    %v413 = vpop.permute.xlu0 %412
    %414 = vrot.lane.b32.xlu0 %v401, 64
    %v415 = vpop.permute.xlu0 %414
    %v418 = vmul.f32 %v398, %v413
    %v419 = vmul.f32 %v399, %v415
    %422 = vrot.lane.b32.xlu0 %v418, 32
    %v423 = vpop.permute.xlu0 %422
    %424 = vrot.lane.b32.xlu0 %v419, 32
    %v425 = vpop.permute.xlu0 %424
    %v428 = vadd.f32 %v408, %v423
    %v429 = vadd.f32 %v409, %v425
    %v430 = vtanh.pop %v428
    %v431 = vtanh.pop %v429
    %434 = vrot.lane.b32.xlu0 %v430, 64
    %v435 = vpop.permute.xlu0 %434
    %436 = vrot.lane.b32.xlu0 %v431, 64
    %v437 = vpop.permute.xlu0 %436
    %v440 = vmul.f32 %v398, %v435
    %v441 = vmul.f32 %v399, %v437
    %v444 = vrot.slane %v440, 1
    %v445 = vsel %vm310, %v441, %v444
    %446 = vrot.lane.b32.xlu0 %v445, 32
    %v447 = vpop.permute.xlu0 %446
    %v448 = vsel %vm183, %v447, 0
    %450 = vmatprep.subr.mxu0 0.0
    %451 = vmatpush1.msra.mxu0 %v90
    %452 = vmatprep.subr.mxu0 0.0
    %453 = vmatpush1.msra.mxu0 %v91
    %454 = vmatprep.subr.mxu0 0.0
    %455 = vmatpush1.msra.mxu0 %v92
    %456 = vmatprep.subr.mxu0 0.0
    %457 = vmatpush1.msra.mxu0 %v93
    %458 = vmatprep.subr.mxu0 0.0
    %459 = vmatpush1.msra.mxu0 0.0
    %460 = vmatprep.subr.mxu0 0.0
    %461 = vmatpush1.msra.mxu0 0.0
    %462 = vmatprep.subr.mxu0 0.0
    %463 = vmatpush1.msra.mxu0 0.0
    %464 = vmatprep.subr.mxu0 0.0
    %465 = vmatpush1.msra.mxu0 0.0
    %466 = vmatprep.subr.mxu0 0.0
    %467 = vmatpush1.msra.mxu0 0.0
    %468 = vmatprep.subr.mxu0 0.0
    %469 = vmatpush1.msra.mxu0 0.0
    %470 = vmatprep.subr.mxu0 0.0
    %471 = vmatpush1.msra.mxu0 0.0
    %472 = vmatprep.subr.mxu0 0.0
    %473 = vmatpush1.msra.mxu0 0.0
    %474 = vmatprep.subr.mxu0 0.0
    %475 = vmatpush1.msra.mxu0 0.0
    %476 = vmatprep.subr.mxu0 0.0
    %477 = vmatpush1.msra.mxu0 0.0
    %478 = vmatprep.subr.mxu0 0.0
    %479 = vmatpush1.msra.mxu0 0.0
    %480 = vmatprep.subr.mxu0 0.0
    %481 = vmatpush1.msra.mxu0 0.0
    %482 = vmatprep.subr.mxu0 0.0
    %483 = vmatpush1.msra.mxu0 0.0
    %484 = vmatprep.subr.mxu0 0.0
    %485 = vmatpush1.msra.mxu0 0.0
    %486 = vmatprep.subr.mxu0 0.0
    %487 = vmatpush1.msra.mxu0 0.0
    %488 = vmatprep.subr.mxu0 0.0
    %489 = vmatpush1.msra.mxu0 0.0
    %490 = vmatprep.subr.mxu0 0.0
    %491 = vmatpush1.msra.mxu0 0.0
    %492 = vmatprep.subr.mxu0 0.0
    %493 = vmatpush1.msra.mxu0 0.0
    %494 = vmatprep.subr.mxu0 0.0
    %495 = vmatpush1.msra.mxu0 0.0
    %496 = vmatprep.subr.mxu0 0.0
    %497 = vmatpush1.msra.mxu0 0.0
    %498 = vmatprep.subr.mxu0 0.0
    %499 = vmatpush1.msra.mxu0 0.0
    %500 = vmatprep.subr.mxu0 0.0
    %501 = vmatpush1.msra.mxu0 0.0
    %502 = vmatprep.subr.mxu0 0.0
    %503 = vmatpush1.msra.mxu0 0.0
    %504 = vmatprep.subr.mxu0 0.0
    %505 = vmatpush1.msra.mxu0 0.0
    %506 = vmatprep.subr.mxu0 0.0
    %507 = vmatpush1.msra.mxu0 0.0
    %508 = vmatprep.subr.mxu0 0.0
    %509 = vmatpush1.msra.mxu0 0.0
    %510 = vmatprep.subr.mxu0 0.0
    %511 = vmatpush1.msra.mxu0 0.0
    %512 = vmatprep.subr.mxu0 0.0
    %513 = vmatpush1.msra.mxu0 0.0
    %514 = vmatprep.mubr.f32.mxu0 0.0
    %515 = vmatmul.mubr.f32.gmra.mrb[0].mxu0 %v448
    %v516 = vpop.f32.mrb[0].mxu0
    %v517 = vadd.f32 0.0, %v516
    %v518 = vpop.f32.mrb[0].mxu0
    %519 = vdwg.mxu0
    %v521 = vrot.slane %v517, 6
    %v522 = vrot.slane %v517, 7
    %v525 = vadd.f32 %v175, %v521
    %v526 = vadd.f32 %v180, %v522
    %v527 = vmul.f32 %v525, 0.5
    %v528 = vmul.f32 %v526, 0.5
    %v529 = vtanh.pop %v527
    %v530 = vtanh.pop %v528
    %v531 = vadd.f32 %v529, 1.0
    %v532 = vadd.f32 %v530, 1.0
    %v533 = vmul.f32 %v531, 0.5
    %v534 = vmul.f32 %v532, 0.5
    %v535 = vtanh.pop %v525
    %v536 = vtanh.pop %v526
    %v539 = vrot.slane %v428, 7
    %v540 = vrot.slane %v429, 7
    %v543 = vmul.f32 %v533, %v539
    %v544 = vmul.f32 %v534, %v540
    %547 = vrot.lane.b32.xlu0 %v535, 64
    %v548 = vpop.permute.xlu0 %547
    %549 = vrot.lane.b32.xlu0 %v536, 64
    %v550 = vpop.permute.xlu0 %549
    %v553 = vmul.f32 %v533, %v548
    %v554 = vmul.f32 %v534, %v550
    %557 = vrot.lane.b32.xlu0 %v553, 32
    %v558 = vpop.permute.xlu0 %557
    %559 = vrot.lane.b32.xlu0 %v554, 32
    %v560 = vpop.permute.xlu0 %559
    %v563 = vadd.f32 %v543, %v558
    %v564 = vadd.f32 %v544, %v560
    %v565 = vtanh.pop %v563
    %v566 = vtanh.pop %v564
    %569 = vrot.lane.b32.xlu0 %v565, 64
    %v570 = vpop.permute.xlu0 %569
    %571 = vrot.lane.b32.xlu0 %v566, 64
    %v572 = vpop.permute.xlu0 %571
    %v575 = vmul.f32 %v533, %v570
    %v576 = vmul.f32 %v534, %v572
    %v579 = vrot.slane %v575, 2
    %v580 = vrot.slane %v576, 1
    %v581 = vsel %vm310, %v580, %v579
    %582 = vrot.lane.b32.xlu0 %v581, 32
    %v583 = vpop.permute.xlu0 %582
    %v584 = vsel %vm183, %v583, 0
    %586 = vmatprep.subr.mxu0 0.0
    %587 = vmatpush1.msra.mxu0 %v90
    %588 = vmatprep.subr.mxu0 0.0
    %589 = vmatpush1.msra.mxu0 %v91
    %590 = vmatprep.subr.mxu0 0.0
    %591 = vmatpush1.msra.mxu0 %v92
    %592 = vmatprep.subr.mxu0 0.0
    %593 = vmatpush1.msra.mxu0 %v93
    %594 = vmatprep.subr.mxu0 0.0
    %595 = vmatpush1.msra.mxu0 0.0
    %596 = vmatprep.subr.mxu0 0.0
    %597 = vmatpush1.msra.mxu0 0.0
    %598 = vmatprep.subr.mxu0 0.0
    %599 = vmatpush1.msra.mxu0 0.0
    %600 = vmatprep.subr.mxu0 0.0
    %601 = vmatpush1.msra.mxu0 0.0
    %602 = vmatprep.subr.mxu0 0.0
    %603 = vmatpush1.msra.mxu0 0.0
    %604 = vmatprep.subr.mxu0 0.0
    %605 = vmatpush1.msra.mxu0 0.0
    %606 = vmatprep.subr.mxu0 0.0
    %607 = vmatpush1.msra.mxu0 0.0
    %608 = vmatprep.subr.mxu0 0.0
    %609 = vmatpush1.msra.mxu0 0.0
    %610 = vmatprep.subr.mxu0 0.0
    %611 = vmatpush1.msra.mxu0 0.0
    %612 = vmatprep.subr.mxu0 0.0
    %613 = vmatpush1.msra.mxu0 0.0
    %614 = vmatprep.subr.mxu0 0.0
    %615 = vmatpush1.msra.mxu0 0.0
    %616 = vmatprep.subr.mxu0 0.0
    %617 = vmatpush1.msra.mxu0 0.0
    %618 = vmatprep.subr.mxu0 0.0
    %619 = vmatpush1.msra.mxu0 0.0
    %620 = vmatprep.subr.mxu0 0.0
    %621 = vmatpush1.msra.mxu0 0.0
    %622 = vmatprep.subr.mxu0 0.0
    %623 = vmatpush1.msra.mxu0 0.0
    %624 = vmatprep.subr.mxu0 0.0
    %625 = vmatpush1.msra.mxu0 0.0
    %626 = vmatprep.subr.mxu0 0.0
    %627 = vmatpush1.msra.mxu0 0.0
    %628 = vmatprep.subr.mxu0 0.0
    %629 = vmatpush1.msra.mxu0 0.0
    %630 = vmatprep.subr.mxu0 0.0
    %631 = vmatpush1.msra.mxu0 0.0
    %632 = vmatprep.subr.mxu0 0.0
    %633 = vmatpush1.msra.mxu0 0.0
    %634 = vmatprep.subr.mxu0 0.0
    %635 = vmatpush1.msra.mxu0 0.0
    %636 = vmatprep.subr.mxu0 0.0
    %637 = vmatpush1.msra.mxu0 0.0
    %638 = vmatprep.subr.mxu0 0.0
    %639 = vmatpush1.msra.mxu0 0.0
    %640 = vmatprep.subr.mxu0 0.0
    %641 = vmatpush1.msra.mxu0 0.0
    %642 = vmatprep.subr.mxu0 0.0
    %643 = vmatpush1.msra.mxu0 0.0
    %644 = vmatprep.subr.mxu0 0.0
    %645 = vmatpush1.msra.mxu0 0.0
    %646 = vmatprep.subr.mxu0 0.0
    %647 = vmatpush1.msra.mxu0 0.0
    %648 = vmatprep.subr.mxu0 0.0
    %649 = vmatpush1.msra.mxu0 0.0
    %650 = vmatprep.mubr.f32.mxu0 0.0
    %651 = vmatmul.mubr.f32.gmra.mrb[0].mxu0 %v584
    %v652 = vpop.f32.mrb[0].mxu0
    %v653 = vadd.f32 0.0, %v652
    %v654 = vpop.f32.mrb[0].mxu0
    %655 = vdwg.mxu0
    %v657 = vrot.slane %v653, 5
    %v658 = vrot.slane %v653, 6
    %v661 = vadd.f32 %v175, %v657
    %v662 = vadd.f32 %v180, %v658
    %v663 = vmul.f32 %v661, 0.5
    %v664 = vmul.f32 %v662, 0.5
    %v665 = vtanh.pop %v663
    %v666 = vtanh.pop %v664
    %v667 = vadd.f32 %v665, 1.0
    %v668 = vadd.f32 %v666, 1.0
    %v669 = vmul.f32 %v667, 0.5
    %v670 = vmul.f32 %v668, 0.5
    %v671 = vtanh.pop %v661
    %v672 = vtanh.pop %v662
    %v675 = vrot.slane %v563, 7
    %v676 = vrot.slane %v564, 7
    %v679 = vmul.f32 %v669, %v675
    %v680 = vmul.f32 %v670, %v676
    %683 = vrot.lane.b32.xlu0 %v671, 64
    %v684 = vpop.permute.xlu0 %683
    %685 = vrot.lane.b32.xlu0 %v672, 64
    %v686 = vpop.permute.xlu0 %685
    %v689 = vmul.f32 %v669, %v684
    %v690 = vmul.f32 %v670, %v686
    %693 = vrot.lane.b32.xlu0 %v689, 32
    %v694 = vpop.permute.xlu0 %693
    %695 = vrot.lane.b32.xlu0 %v690, 32
    %v696 = vpop.permute.xlu0 %695
    %v699 = vadd.f32 %v679, %v694
    %v700 = vadd.f32 %v680, %v696
    %v701 = vtanh.pop %v699
    %v702 = vtanh.pop %v700
    %705 = vrot.lane.b32.xlu0 %v701, 64
    %v706 = vpop.permute.xlu0 %705
    %707 = vrot.lane.b32.xlu0 %v702, 64
    %v708 = vpop.permute.xlu0 %707
    %v711 = vmul.f32 %v669, %v706
    %v712 = vmul.f32 %v670, %v708
    %v715 = vrot.slane %v711, 3
    %v716 = vrot.slane %v712, 2
    %v717 = vsel %vm310, %v716, %v715
    %718 = vrot.lane.b32.xlu0 %v717, 32
    %v719 = vpop.permute.xlu0 %718
    %v720 = vsel %vm183, %v719, 0
    %722 = vmatprep.subr.mxu0 0.0
    %723 = vmatpush1.msra.mxu0 %v90
    %724 = vmatprep.subr.mxu0 0.0
    %725 = vmatpush1.msra.mxu0 %v91
    %726 = vmatprep.subr.mxu0 0.0
    %727 = vmatpush1.msra.mxu0 %v92
    %728 = vmatprep.subr.mxu0 0.0
    %729 = vmatpush1.msra.mxu0 %v93
    %730 = vmatprep.subr.mxu0 0.0
    %731 = vmatpush1.msra.mxu0 0.0
    %732 = vmatprep.subr.mxu0 0.0
    %733 = vmatpush1.msra.mxu0 0.0
    %734 = vmatprep.subr.mxu0 0.0
    %735 = vmatpush1.msra.mxu0 0.0
    %736 = vmatprep.subr.mxu0 0.0
    %737 = vmatpush1.msra.mxu0 0.0
    %738 = vmatprep.subr.mxu0 0.0
    %739 = vmatpush1.msra.mxu0 0.0
    %740 = vmatprep.subr.mxu0 0.0
    %741 = vmatpush1.msra.mxu0 0.0
    %742 = vmatprep.subr.mxu0 0.0
    %743 = vmatpush1.msra.mxu0 0.0
    %744 = vmatprep.subr.mxu0 0.0
    %745 = vmatpush1.msra.mxu0 0.0
    %746 = vmatprep.subr.mxu0 0.0
    %747 = vmatpush1.msra.mxu0 0.0
    %748 = vmatprep.subr.mxu0 0.0
    %749 = vmatpush1.msra.mxu0 0.0
    %750 = vmatprep.subr.mxu0 0.0
    %751 = vmatpush1.msra.mxu0 0.0
    %752 = vmatprep.subr.mxu0 0.0
    %753 = vmatpush1.msra.mxu0 0.0
    %754 = vmatprep.subr.mxu0 0.0
    %755 = vmatpush1.msra.mxu0 0.0
    %756 = vmatprep.subr.mxu0 0.0
    %757 = vmatpush1.msra.mxu0 0.0
    %758 = vmatprep.subr.mxu0 0.0
    %759 = vmatpush1.msra.mxu0 0.0
    %760 = vmatprep.subr.mxu0 0.0
    %761 = vmatpush1.msra.mxu0 0.0
    %762 = vmatprep.subr.mxu0 0.0
    %763 = vmatpush1.msra.mxu0 0.0
    %764 = vmatprep.subr.mxu0 0.0
    %765 = vmatpush1.msra.mxu0 0.0
    %766 = vmatprep.subr.mxu0 0.0
    %767 = vmatpush1.msra.mxu0 0.0
    %768 = vmatprep.subr.mxu0 0.0
    %769 = vmatpush1.msra.mxu0 0.0
    %770 = vmatprep.subr.mxu0 0.0
    %771 = vmatpush1.msra.mxu0 0.0
    %772 = vmatprep.subr.mxu0 0.0
    %773 = vmatpush1.msra.mxu0 0.0
    %774 = vmatprep.subr.mxu0 0.0
    %775 = vmatpush1.msra.mxu0 0.0
    %776 = vmatprep.subr.mxu0 0.0
    %777 = vmatpush1.msra.mxu0 0.0
    %778 = vmatprep.subr.mxu0 0.0
    %779 = vmatpush1.msra.mxu0 0.0
    %780 = vmatprep.subr.mxu0 0.0
    %781 = vmatpush1.msra.mxu0 0.0
    %782 = vmatprep.subr.mxu0 0.0
    %783 = vmatpush1.msra.mxu0 0.0
    %784 = vmatprep.subr.mxu0 0.0
    %785 = vmatpush1.msra.mxu0 0.0
    %786 = vmatprep.mubr.f32.mxu0 0.0
    %787 = vmatmul.mubr.f32.gmra.mrb[0].mxu0 %v720
    %v788 = vpop.f32.mrb[0].mxu0
    %v789 = vadd.f32 0.0, %v788
    %v790 = vpop.f32.mrb[0].mxu0
    %791 = vdwg.mxu0
    %v793 = vrot.slane %v789, 4
    %v794 = vrot.slane %v789, 5
    %v797 = vadd.f32 %v175, %v793
    %v798 = vadd.f32 %v180, %v794
    %v799 = vmul.f32 %v797, 0.5
    %v800 = vmul.f32 %v798, 0.5
    %v801 = vtanh.pop %v799
    %v802 = vtanh.pop %v800
    %v803 = vadd.f32 %v801, 1.0
    %v804 = vadd.f32 %v802, 1.0
    %v805 = vmul.f32 %v803, 0.5
    %v806 = vmul.f32 %v804, 0.5
    %v807 = vtanh.pop %v797
    %v808 = vtanh.pop %v798
    %v811 = vrot.slane %v699, 7
    %v812 = vrot.slane %v700, 7
    %v815 = vmul.f32 %v805, %v811
    %v816 = vmul.f32 %v806, %v812
    %819 = vrot.lane.b32.xlu0 %v807, 64
    %v820 = vpop.permute.xlu0 %819
    %821 = vrot.lane.b32.xlu0 %v808, 64
    %v822 = vpop.permute.xlu0 %821
    %v825 = vmul.f32 %v805, %v820
    %v826 = vmul.f32 %v806, %v822
    %829 = vrot.lane.b32.xlu0 %v825, 32
    %v830 = vpop.permute.xlu0 %829
    %831 = vrot.lane.b32.xlu0 %v826, 32
    %v832 = vpop.permute.xlu0 %831
    %v835 = vadd.f32 %v815, %v830
    %v836 = vadd.f32 %v816, %v832
    %v837 = vtanh.pop %v835
    %v838 = vtanh.pop %v836
    %841 = vrot.lane.b32.xlu0 %v837, 64
    %v842 = vpop.permute.xlu0 %841
    %843 = vrot.lane.b32.xlu0 %v838, 64
    %v844 = vpop.permute.xlu0 %843
    %v847 = vmul.f32 %v805, %v842
    %v848 = vmul.f32 %v806, %v844
    %v851 = vrot.slane %v847, 4
    %v852 = vrot.slane %v848, 3
    %v853 = vsel %vm310, %v852, %v851
    %854 = vrot.lane.b32.xlu0 %v853, 32
    %v855 = vpop.permute.xlu0 %854
    %v856 = vsel %vm183, %v855, 0
    %858 = vmatprep.subr.mxu0 0.0
    %859 = vmatpush1.msra.mxu0 %v90
    %860 = vmatprep.subr.mxu0 0.0
    %861 = vmatpush1.msra.mxu0 %v91
    %862 = vmatprep.subr.mxu0 0.0
    %863 = vmatpush1.msra.mxu0 %v92
    %864 = vmatprep.subr.mxu0 0.0
    %865 = vmatpush1.msra.mxu0 %v93
    %866 = vmatprep.subr.mxu0 0.0
    %867 = vmatpush1.msra.mxu0 0.0
    %868 = vmatprep.subr.mxu0 0.0
    %869 = vmatpush1.msra.mxu0 0.0
    %870 = vmatprep.subr.mxu0 0.0
    %871 = vmatpush1.msra.mxu0 0.0
    %872 = vmatprep.subr.mxu0 0.0
    %873 = vmatpush1.msra.mxu0 0.0
    %874 = vmatprep.subr.mxu0 0.0
    %875 = vmatpush1.msra.mxu0 0.0
    %876 = vmatprep.subr.mxu0 0.0
    %877 = vmatpush1.msra.mxu0 0.0
    %878 = vmatprep.subr.mxu0 0.0
    %879 = vmatpush1.msra.mxu0 0.0
    %880 = vmatprep.subr.mxu0 0.0
    %881 = vmatpush1.msra.mxu0 0.0
    %882 = vmatprep.subr.mxu0 0.0
    %883 = vmatpush1.msra.mxu0 0.0
    %884 = vmatprep.subr.mxu0 0.0
    %885 = vmatpush1.msra.mxu0 0.0
    %886 = vmatprep.subr.mxu0 0.0
    %887 = vmatpush1.msra.mxu0 0.0
    %888 = vmatprep.subr.mxu0 0.0
    %889 = vmatpush1.msra.mxu0 0.0
    %890 = vmatprep.subr.mxu0 0.0
    %891 = vmatpush1.msra.mxu0 0.0
    %892 = vmatprep.subr.mxu0 0.0
    %893 = vmatpush1.msra.mxu0 0.0
    %894 = vmatprep.subr.mxu0 0.0
    %895 = vmatpush1.msra.mxu0 0.0
    %896 = vmatprep.subr.mxu0 0.0
    %897 = vmatpush1.msra.mxu0 0.0
    %898 = vmatprep.subr.mxu0 0.0
    %899 = vmatpush1.msra.mxu0 0.0
    %900 = vmatprep.subr.mxu0 0.0
    %901 = vmatpush1.msra.mxu0 0.0
    %902 = vmatprep.subr.mxu0 0.0
    %903 = vmatpush1.msra.mxu0 0.0
    %904 = vmatprep.subr.mxu0 0.0
    %905 = vmatpush1.msra.mxu0 0.0
    %906 = vmatprep.subr.mxu0 0.0
    %907 = vmatpush1.msra.mxu0 0.0
    %908 = vmatprep.subr.mxu0 0.0
    %909 = vmatpush1.msra.mxu0 0.0
    %910 = vmatprep.subr.mxu0 0.0
    %911 = vmatpush1.msra.mxu0 0.0
    %912 = vmatprep.subr.mxu0 0.0
    %913 = vmatpush1.msra.mxu0 0.0
    %914 = vmatprep.subr.mxu0 0.0
    %915 = vmatpush1.msra.mxu0 0.0
    %916 = vmatprep.subr.mxu0 0.0
    %917 = vmatpush1.msra.mxu0 0.0
    %918 = vmatprep.subr.mxu0 0.0
    %919 = vmatpush1.msra.mxu0 0.0
    %920 = vmatprep.subr.mxu0 0.0
    %921 = vmatpush1.msra.mxu0 0.0
    %922 = vmatprep.mubr.f32.mxu0 0.0
    %923 = vmatmul.mubr.f32.gmra.mrb[0].mxu0 %v856
    %v924 = vpop.f32.mrb[0].mxu0
    %v925 = vadd.f32 0.0, %v924
    %v926 = vpop.f32.mrb[0].mxu0
    %927 = vdwg.mxu0
    %v929 = vrot.slane %v925, 3
    %v930 = vrot.slane %v925, 4
    %v933 = vadd.f32 %v175, %v929
    %v934 = vadd.f32 %v180, %v930
    %v935 = vmul.f32 %v933, 0.5
    %v936 = vmul.f32 %v934, 0.5
    %v937 = vtanh.pop %v935
    %v938 = vtanh.pop %v936
    %v939 = vadd.f32 %v937, 1.0
    %v940 = vadd.f32 %v938, 1.0
    %v941 = vmul.f32 %v939, 0.5
    %v942 = vmul.f32 %v940, 0.5
    %v943 = vtanh.pop %v933
    %v944 = vtanh.pop %v934
    %v947 = vrot.slane %v835, 7
    %v948 = vrot.slane %v836, 7
    %v951 = vmul.f32 %v941, %v947
    %v952 = vmul.f32 %v942, %v948
    %955 = vrot.lane.b32.xlu0 %v943, 64
    %v956 = vpop.permute.xlu0 %955
    %957 = vrot.lane.b32.xlu0 %v944, 64
    %v958 = vpop.permute.xlu0 %957
    %v961 = vmul.f32 %v941, %v956
    %v962 = vmul.f32 %v942, %v958
    %965 = vrot.lane.b32.xlu0 %v961, 32
    %v966 = vpop.permute.xlu0 %965
    %967 = vrot.lane.b32.xlu0 %v962, 32
    %v968 = vpop.permute.xlu0 %967
    %v971 = vadd.f32 %v951, %v966
    %v972 = vadd.f32 %v952, %v968
    %v973 = vtanh.pop %v971
    %v974 = vtanh.pop %v972
    %977 = vrot.lane.b32.xlu0 %v973, 64
    %v978 = vpop.permute.xlu0 %977
    %979 = vrot.lane.b32.xlu0 %v974, 64
    %v980 = vpop.permute.xlu0 %979
    %v983 = vmul.f32 %v941, %v978
    %v984 = vmul.f32 %v942, %v980
    %v987 = vrot.slane %v983, 5
    %v988 = vrot.slane %v984, 4
    %v989 = vsel %vm310, %v988, %v987
    %990 = vrot.lane.b32.xlu0 %v989, 32
    %v991 = vpop.permute.xlu0 %990
    %v992 = vsel %vm183, %v991, 0
    %994 = vmatprep.subr.mxu0 0.0
    %995 = vmatpush1.msra.mxu0 %v90
    %996 = vmatprep.subr.mxu0 0.0
    %997 = vmatpush1.msra.mxu0 %v91
    %998 = vmatprep.subr.mxu0 0.0
    %999 = vmatpush1.msra.mxu0 %v92
    %1000 = vmatprep.subr.mxu0 0.0
    %1001 = vmatpush1.msra.mxu0 %v93
    %1002 = vmatprep.subr.mxu0 0.0
    %1003 = vmatpush1.msra.mxu0 0.0
    %1004 = vmatprep.subr.mxu0 0.0
    %1005 = vmatpush1.msra.mxu0 0.0
    %1006 = vmatprep.subr.mxu0 0.0
    %1007 = vmatpush1.msra.mxu0 0.0
    %1008 = vmatprep.subr.mxu0 0.0
    %1009 = vmatpush1.msra.mxu0 0.0
    %1010 = vmatprep.subr.mxu0 0.0
    %1011 = vmatpush1.msra.mxu0 0.0
    %1012 = vmatprep.subr.mxu0 0.0
    %1013 = vmatpush1.msra.mxu0 0.0
    %1014 = vmatprep.subr.mxu0 0.0
    %1015 = vmatpush1.msra.mxu0 0.0
    %1016 = vmatprep.subr.mxu0 0.0
    %1017 = vmatpush1.msra.mxu0 0.0
    %1018 = vmatprep.subr.mxu0 0.0
    %1019 = vmatpush1.msra.mxu0 0.0
    %1020 = vmatprep.subr.mxu0 0.0
    %1021 = vmatpush1.msra.mxu0 0.0
    %1022 = vmatprep.subr.mxu0 0.0
    %1023 = vmatpush1.msra.mxu0 0.0
    %1024 = vmatprep.subr.mxu0 0.0
    %1025 = vmatpush1.msra.mxu0 0.0
    %1026 = vmatprep.subr.mxu0 0.0
    %1027 = vmatpush1.msra.mxu0 0.0
    %1028 = vmatprep.subr.mxu0 0.0
    %1029 = vmatpush1.msra.mxu0 0.0
    %1030 = vmatprep.subr.mxu0 0.0
    %1031 = vmatpush1.msra.mxu0 0.0
    %1032 = vmatprep.subr.mxu0 0.0
    %1033 = vmatpush1.msra.mxu0 0.0
    %1034 = vmatprep.subr.mxu0 0.0
    %1035 = vmatpush1.msra.mxu0 0.0
    %1036 = vmatprep.subr.mxu0 0.0
    %1037 = vmatpush1.msra.mxu0 0.0
    %1038 = vmatprep.subr.mxu0 0.0
    %1039 = vmatpush1.msra.mxu0 0.0
    %1040 = vmatprep.subr.mxu0 0.0
    %1041 = vmatpush1.msra.mxu0 0.0
    %1042 = vmatprep.subr.mxu0 0.0
    %1043 = vmatpush1.msra.mxu0 0.0
    %1044 = vmatprep.subr.mxu0 0.0
    %1045 = vmatpush1.msra.mxu0 0.0
    %1046 = vmatprep.subr.mxu0 0.0
    %1047 = vmatpush1.msra.mxu0 0.0
    %1048 = vmatprep.subr.mxu0 0.0
    %1049 = vmatpush1.msra.mxu0 0.0
    %1050 = vmatprep.subr.mxu0 0.0
    %1051 = vmatpush1.msra.mxu0 0.0
    %1052 = vmatprep.subr.mxu0 0.0
    %1053 = vmatpush1.msra.mxu0 0.0
    %1054 = vmatprep.subr.mxu0 0.0
    %1055 = vmatpush1.msra.mxu0 0.0
    %1056 = vmatprep.subr.mxu0 0.0
    %1057 = vmatpush1.msra.mxu0 0.0
    %1058 = vmatprep.mubr.f32.mxu0 0.0
    %1059 = vmatmul.mubr.f32.gmra.mrb[0].mxu0 %v992
    %v1060 = vpop.f32.mrb[0].mxu0
    %v1061 = vadd.f32 0.0, %v1060
    %v1062 = vpop.f32.mrb[0].mxu0
    %1063 = vdwg.mxu0
    %v1065 = vrot.slane %v1061, 2
    %v1066 = vrot.slane %v1061, 3
    %v1069 = vadd.f32 %v175, %v1065
    %v1070 = vadd.f32 %v180, %v1066
    %v1071 = vmul.f32 %v1069, 0.5
    %v1072 = vmul.f32 %v1070, 0.5
    %v1073 = vtanh.pop %v1071
    %v1074 = vtanh.pop %v1072
    %v1075 = vadd.f32 %v1073, 1.0
    %v1076 = vadd.f32 %v1074, 1.0
    %v1077 = vmul.f32 %v1075, 0.5
    %v1078 = vmul.f32 %v1076, 0.5
    %v1079 = vtanh.pop %v1069
    %v1080 = vtanh.pop %v1070
    %v1083 = vrot.slane %v971, 7
    %v1084 = vrot.slane %v972, 7
    %v1087 = vmul.f32 %v1077, %v1083
    %v1088 = vmul.f32 %v1078, %v1084
    %1091 = vrot.lane.b32.xlu0 %v1079, 64
    %v1092 = vpop.permute.xlu0 %1091
    %1093 = vrot.lane.b32.xlu0 %v1080, 64
    %v1094 = vpop.permute.xlu0 %1093
    %v1097 = vmul.f32 %v1077, %v1092
    %v1098 = vmul.f32 %v1078, %v1094
    %1101 = vrot.lane.b32.xlu0 %v1097, 32
    %v1102 = vpop.permute.xlu0 %1101
    %1103 = vrot.lane.b32.xlu0 %v1098, 32
    %v1104 = vpop.permute.xlu0 %1103
    %v1107 = vadd.f32 %v1087, %v1102
    %v1108 = vadd.f32 %v1088, %v1104
    %v1109 = vtanh.pop %v1107
    %v1110 = vtanh.pop %v1108
    %1113 = vrot.lane.b32.xlu0 %v1109, 64
    %v1114 = vpop.permute.xlu0 %1113
    %1115 = vrot.lane.b32.xlu0 %v1110, 64
    %v1116 = vpop.permute.xlu0 %1115
    %v1119 = vmul.f32 %v1077, %v1114
    %v1120 = vmul.f32 %v1078, %v1116
    %v1123 = vrot.slane %v1119, 6
    %v1124 = vrot.slane %v1120, 5
    %v1125 = vsel %vm310, %v1124, %v1123
    %1126 = vrot.lane.b32.xlu0 %v1125, 32
    %v1127 = vpop.permute.xlu0 %1126
    %v1128 = vsel %vm183, %v1127, 0
    %1130 = vmatprep.subr.mxu0 0.0
    %1131 = vmatpush1.msra.mxu0 %v90
    %1132 = vmatprep.subr.mxu0 0.0
    %1133 = vmatpush1.msra.mxu0 %v91
    %1134 = vmatprep.subr.mxu0 0.0
    %1135 = vmatpush1.msra.mxu0 %v92
    %1136 = vmatprep.subr.mxu0 0.0
    %1137 = vmatpush1.msra.mxu0 %v93
    %1138 = vmatprep.subr.mxu0 0.0
    %1139 = vmatpush1.msra.mxu0 0.0
    %1140 = vmatprep.subr.mxu0 0.0
    %1141 = vmatpush1.msra.mxu0 0.0
    %1142 = vmatprep.subr.mxu0 0.0
    %1143 = vmatpush1.msra.mxu0 0.0
    %1144 = vmatprep.subr.mxu0 0.0
    %1145 = vmatpush1.msra.mxu0 0.0
    %1146 = vmatprep.subr.mxu0 0.0
    %1147 = vmatpush1.msra.mxu0 0.0
    %1148 = vmatprep.subr.mxu0 0.0
    %1149 = vmatpush1.msra.mxu0 0.0
    %1150 = vmatprep.subr.mxu0 0.0
    %1151 = vmatpush1.msra.mxu0 0.0
    %1152 = vmatprep.subr.mxu0 0.0
    %1153 = vmatpush1.msra.mxu0 0.0
    %1154 = vmatprep.subr.mxu0 0.0
    %1155 = vmatpush1.msra.mxu0 0.0
    %1156 = vmatprep.subr.mxu0 0.0
    %1157 = vmatpush1.msra.mxu0 0.0
    %1158 = vmatprep.subr.mxu0 0.0
    %1159 = vmatpush1.msra.mxu0 0.0
    %1160 = vmatprep.subr.mxu0 0.0
    %1161 = vmatpush1.msra.mxu0 0.0
    %1162 = vmatprep.subr.mxu0 0.0
    %1163 = vmatpush1.msra.mxu0 0.0
    %1164 = vmatprep.subr.mxu0 0.0
    %1165 = vmatpush1.msra.mxu0 0.0
    %1166 = vmatprep.subr.mxu0 0.0
    %1167 = vmatpush1.msra.mxu0 0.0
    %1168 = vmatprep.subr.mxu0 0.0
    %1169 = vmatpush1.msra.mxu0 0.0
    %1170 = vmatprep.subr.mxu0 0.0
    %1171 = vmatpush1.msra.mxu0 0.0
    %1172 = vmatprep.subr.mxu0 0.0
    %1173 = vmatpush1.msra.mxu0 0.0
    %1174 = vmatprep.subr.mxu0 0.0
    %1175 = vmatpush1.msra.mxu0 0.0
    %1176 = vmatprep.subr.mxu0 0.0
    %1177 = vmatpush1.msra.mxu0 0.0
    %1178 = vmatprep.subr.mxu0 0.0
    %1179 = vmatpush1.msra.mxu0 0.0
    %1180 = vmatprep.subr.mxu0 0.0
    %1181 = vmatpush1.msra.mxu0 0.0
    %1182 = vmatprep.subr.mxu0 0.0
    %1183 = vmatpush1.msra.mxu0 0.0
    %1184 = vmatprep.subr.mxu0 0.0
    %1185 = vmatpush1.msra.mxu0 0.0
    %1186 = vmatprep.subr.mxu0 0.0
    %1187 = vmatpush1.msra.mxu0 0.0
    %1188 = vmatprep.subr.mxu0 0.0
    %1189 = vmatpush1.msra.mxu0 0.0
    %1190 = vmatprep.subr.mxu0 0.0
    %1191 = vmatpush1.msra.mxu0 0.0
    %1192 = vmatprep.subr.mxu0 0.0
    %1193 = vmatpush1.msra.mxu0 0.0
    %1194 = vmatprep.mubr.f32.mxu0 0.0
    %1195 = vmatmul.mubr.f32.gmra.mrb[0].mxu0 %v1128
    %v1196 = vpop.f32.mrb[0].mxu0
    %v1197 = vadd.f32 0.0, %v1196
    %v1198 = vpop.f32.mrb[0].mxu0
    %1199 = vdwg.mxu0
    %v1201 = vrot.slane %v1197, 1
    %v1202 = vrot.slane %v1197, 2
    %v1205 = vadd.f32 %v175, %v1201
    %v1206 = vadd.f32 %v180, %v1202
    %v1207 = vmul.f32 %v1205, 0.5
    %v1208 = vmul.f32 %v1206, 0.5
    %v1209 = vtanh.pop %v1207
    %v1210 = vtanh.pop %v1208
    %v1211 = vadd.f32 %v1209, 1.0
    %v1212 = vadd.f32 %v1210, 1.0
    %v1213 = vmul.f32 %v1211, 0.5
    %v1214 = vmul.f32 %v1212, 0.5
    %v1215 = vtanh.pop %v1205
    %v1216 = vtanh.pop %v1206
    %v1219 = vrot.slane %v1107, 7
    %v1220 = vrot.slane %v1108, 7
    %v1223 = vmul.f32 %v1213, %v1219
    %v1224 = vmul.f32 %v1214, %v1220
    %1227 = vrot.lane.b32.xlu0 %v1215, 64
    %v1228 = vpop.permute.xlu0 %1227
    %1229 = vrot.lane.b32.xlu0 %v1216, 64
    %v1230 = vpop.permute.xlu0 %1229
    %v1233 = vmul.f32 %v1213, %v1228
    %v1234 = vmul.f32 %v1214, %v1230
    %1237 = vrot.lane.b32.xlu0 %v1233, 32
    %v1238 = vpop.permute.xlu0 %1237
    %1239 = vrot.lane.b32.xlu0 %v1234, 32
    %v1240 = vpop.permute.xlu0 %1239
    %v1243 = vadd.f32 %v1223, %v1238
    %v1244 = vadd.f32 %v1224, %v1240
    %v1245 = vtanh.pop %v1243
    %v1246 = vtanh.pop %v1244
    %1249 = vrot.lane.b32.xlu0 %v1245, 64
    %v1250 = vpop.permute.xlu0 %1249
    %1251 = vrot.lane.b32.xlu0 %v1246, 64
    %v1252 = vpop.permute.xlu0 %1251
    %v1255 = vmul.f32 %v1213, %v1250
    %v1256 = vmul.f32 %v1214, %v1252
    %v1258 = vrot.slane %v440, 7
    %v1259 = vrot.slane %v441, 6
    %vm1260 = vcmask 1043459
    %v1261 = vsel %vm1260, %v1259, %v1258
    %v1263 = vrot.slane %v575, 6
    %v1264 = vrot.slane %v576, 5
    %vm1265 = vcmask 1045509
    %v1266 = vsel %vm1265, %v1264, %v1263
    %v1268 = vrot.slane %v711, 5
    %v1269 = vrot.slane %v712, 4
    %vm1270 = vcmask 1047559
    %v1271 = vsel %vm1270, %v1269, %v1268
    %v1274 = vrot.slane %v983, 3
    %v1275 = vrot.slane %v984, 2
    %v1276 = vsel %vm1260, %v1275, %v1274
    %v1278 = vrot.slane %v1119, 2
    %v1279 = vrot.slane %v1120, 1
    %v1280 = vsel %vm1265, %v1279, %v1278
    %v1284 = vrot.slane %v1255, 1
    %v1285 = vsel %vm1270, %v1256, %v1284
    %vm1287 = vcmask 1041408
    %v1288 = vsel %vm1287, %v311, %v1261
    %vm1289 = vcmask 1043456
    %v1290 = vsel %vm1289, %v1288, %v1266
    %vm1291 = vcmask 1045504
    %v1292 = vsel %vm1291, %v1290, %v1271
    %v1293 = vsel %vm1287, %v853, %v1276
    %v1294 = vsel %vm1289, %v1293, %v1280
    %v1295 = vsel %vm1291, %v1294, %v1285
    %v1296 = vld [vmem:[%s4] sm:$0xff]
    %v1297 = vld [vmem:[%s4 + $0x8] sm:$0xff]
    %v1298 = vld [vmem:[%s4 + $0x10] sm:$0xff]
    %v1299 = vld [vmem:[%s4 + $0x18] sm:$0xff]
    %v1300 = vld [vmem:[#allocation7] sm:$0xff]
    %v1301 = vld [vmem:[#allocation7 + $0x8] sm:$0xff]
    %v1302 = vld [vmem:[#allocation7 + $0x10] sm:$0xff]
    %v1303 = vld [vmem:[#allocation7 + $0x18] sm:$0xff]
    %v1304 = vld [vmem:[%s6] sm:$0x1]
    %v1306 = vlaneseq
    %v1307 = vshrl.u32 %v1306, 7
    %v1308 = vsub.s32 0, %v1307
    %v1309 = vrot.slane %v1304, %v1308
    %1313 = vrot.lane.b32.xlu0 %v1292, 32
    %v1314 = vpop.permute.xlu0 %1313
    %1315 = vrot.lane.b32.xlu0 %v1295, 32
    %v1316 = vpop.permute.xlu0 %1315
    %v1317 = vsel %vm183, %v1314, 0
    %v1319 = vsel %vm183, %v1316, 0
    %1321 = vmatprep.subr.mxu0 0.0
    %1322 = vmatpush1.msra.mxu0 %v1296
    %1323 = vmatprep.subr.mxu0 0.0
    %1324 = vmatpush1.msra.mxu0 %v1297
    %1325 = vmatprep.subr.mxu0 0.0
    %1326 = vmatpush1.msra.mxu0 %v1298
    %1327 = vmatprep.subr.mxu0 0.0
    %1328 = vmatpush1.msra.mxu0 %v1299
    %1329 = vmatprep.subr.mxu0 0.0
    %1330 = vmatpush1.msra.mxu0 0.0
    %1331 = vmatprep.subr.mxu0 0.0
    %1332 = vmatpush1.msra.mxu0 0.0
    %1333 = vmatprep.subr.mxu0 0.0
    %1334 = vmatpush1.msra.mxu0 0.0
    %1335 = vmatprep.subr.mxu0 0.0
    %1336 = vmatpush1.msra.mxu0 0.0
    %1337 = vmatprep.subr.mxu0 0.0
    %1338 = vmatpush1.msra.mxu0 0.0
    %1339 = vmatprep.subr.mxu0 0.0
    %1340 = vmatpush1.msra.mxu0 0.0
    %1341 = vmatprep.subr.mxu0 0.0
    %1342 = vmatpush1.msra.mxu0 0.0
    %1343 = vmatprep.subr.mxu0 0.0
    %1344 = vmatpush1.msra.mxu0 0.0
    %1345 = vmatprep.subr.mxu0 0.0
    %1346 = vmatpush1.msra.mxu0 0.0
    %1347 = vmatprep.subr.mxu0 0.0
    %1348 = vmatpush1.msra.mxu0 0.0
    %1349 = vmatprep.subr.mxu0 0.0
    %1350 = vmatpush1.msra.mxu0 0.0
    %1351 = vmatprep.subr.mxu0 0.0
    %1352 = vmatpush1.msra.mxu0 0.0
    %1353 = vmatprep.subr.mxu0 0.0
    %1354 = vmatpush1.msra.mxu0 0.0
    %1355 = vmatprep.subr.mxu0 0.0
    %1356 = vmatpush1.msra.mxu0 0.0
    %1357 = vmatprep.subr.mxu0 0.0
    %1358 = vmatpush1.msra.mxu0 0.0
    %1359 = vmatprep.subr.mxu0 0.0
    %1360 = vmatpush1.msra.mxu0 0.0
    %1361 = vmatprep.subr.mxu0 0.0
    %1362 = vmatpush1.msra.mxu0 0.0
    %1363 = vmatprep.subr.mxu0 0.0
    %1364 = vmatpush1.msra.mxu0 0.0
    %1365 = vmatprep.subr.mxu0 0.0
    %1366 = vmatpush1.msra.mxu0 0.0
    %1367 = vmatprep.subr.mxu0 0.0
    %1368 = vmatpush1.msra.mxu0 0.0
    %1369 = vmatprep.subr.mxu0 0.0
    %1370 = vmatpush1.msra.mxu0 0.0
    %1371 = vmatprep.subr.mxu0 0.0
    %1372 = vmatpush1.msra.mxu0 0.0
    %1373 = vmatprep.subr.mxu0 0.0
    %1374 = vmatpush1.msra.mxu0 0.0
    %1375 = vmatprep.subr.mxu0 0.0
    %1376 = vmatpush1.msra.mxu0 0.0
    %1377 = vmatprep.subr.mxu0 0.0
    %1378 = vmatpush1.msra.mxu0 0.0
    %1379 = vmatprep.subr.mxu0 0.0
    %1380 = vmatpush1.msra.mxu0 0.0
    %1381 = vmatprep.subr.mxu0 0.0
    %1382 = vmatpush1.msra.mxu0 0.0
    %1383 = vmatprep.subr.mxu0 0.0
    %1384 = vmatpush1.msra.mxu0 0.0
    %1385 = vmatprep.mubr.f32.mxu0 0.0
    %1386 = vmatmul.mubr.f32.gmra.mrb[0].mxu0 %v1317
    %v1387 = vpop.f32.mrb[0].mxu0
    %v1388 = vadd.f32 %v1309, %v1387
    %v1389 = vpop.f32.mrb[0].mxu0
    %1390 = vmatprep.mubr.f32.mxu0 0.0
    %1391 = vmatmul.mubr.f32.gmra.mrb[0].mxu0 %v1319
    %v1392 = vpop.f32.mrb[0].mxu0
    %v1393 = vadd.f32 %v1309, %v1392
    %v1394 = vpop.f32.mrb[0].mxu0
    %1395 = vdwg.mxu0
    %1396 = vmatprep.subr.mxu0 0.0
    %1397 = vmatpush1.msra.mxu0 %v1300
    %1398 = vmatprep.subr.mxu0 0.0
    %1399 = vmatpush1.msra.mxu0 %v1301
    %1400 = vmatprep.subr.mxu0 0.0
    %1401 = vmatpush1.msra.mxu0 %v1302
    %1402 = vmatprep.subr.mxu0 0.0
    %1403 = vmatpush1.msra.mxu0 %v1303
    %1404 = vmatprep.subr.mxu0 0.0
    %1405 = vmatpush1.msra.mxu0 0.0
    %1406 = vmatprep.subr.mxu0 0.0
    %1407 = vmatpush1.msra.mxu0 0.0
    %1408 = vmatprep.subr.mxu0 0.0
    %1409 = vmatpush1.msra.mxu0 0.0
    %1410 = vmatprep.subr.mxu0 0.0
    %1411 = vmatpush1.msra.mxu0 0.0
    %1412 = vmatprep.subr.mxu0 0.0
    %1413 = vmatpush1.msra.mxu0 0.0
    %1414 = vmatprep.subr.mxu0 0.0
    %1415 = vmatpush1.msra.mxu0 0.0
    %1416 = vmatprep.subr.mxu0 0.0
    %1417 = vmatpush1.msra.mxu0 0.0
    %1418 = vmatprep.subr.mxu0 0.0
    %1419 = vmatpush1.msra.mxu0 0.0
    %1420 = vmatprep.subr.mxu0 0.0
    %1421 = vmatpush1.msra.mxu0 0.0
    %1422 = vmatprep.subr.mxu0 0.0
    %1423 = vmatpush1.msra.mxu0 0.0
    %1424 = vmatprep.subr.mxu0 0.0
    %1425 = vmatpush1.msra.mxu0 0.0
    %1426 = vmatprep.subr.mxu0 0.0
    %1427 = vmatpush1.msra.mxu0 0.0
    %1428 = vmatprep.subr.mxu0 0.0
    %1429 = vmatpush1.msra.mxu0 0.0
    %1430 = vmatprep.subr.mxu0 0.0
    %1431 = vmatpush1.msra.mxu0 0.0
    %1432 = vmatprep.subr.mxu0 0.0
    %1433 = vmatpush1.msra.mxu0 0.0
    %1434 = vmatprep.subr.mxu0 0.0
    %1435 = vmatpush1.msra.mxu0 0.0
    %1436 = vmatprep.subr.mxu0 0.0
    %1437 = vmatpush1.msra.mxu0 0.0
    %1438 = vmatprep.subr.mxu0 0.0
    %1439 = vmatpush1.msra.mxu0 0.0
    %1440 = vmatprep.subr.mxu0 0.0
    %1441 = vmatpush1.msra.mxu0 0.0
    %1442 = vmatprep.subr.mxu0 0.0
    %1443 = vmatpush1.msra.mxu0 0.0
    %1444 = vmatprep.subr.mxu0 0.0
    %1445 = vmatpush1.msra.mxu0 0.0
    %1446 = vmatprep.subr.mxu0 0.0
    %1447 = vmatpush1.msra.mxu0 0.0
    %1448 = vmatprep.subr.mxu0 0.0
    %1449 = vmatpush1.msra.mxu0 0.0
    %1450 = vmatprep.subr.mxu0 0.0
    %1451 = vmatpush1.msra.mxu0 0.0
    %1452 = vmatprep.subr.mxu0 0.0
    %1453 = vmatpush1.msra.mxu0 0.0
    %1454 = vmatprep.subr.mxu0 0.0
    %1455 = vmatpush1.msra.mxu0 0.0
    %1456 = vmatprep.subr.mxu0 0.0
    %1457 = vmatpush1.msra.mxu0 0.0
    %1458 = vmatprep.subr.mxu0 0.0
    %1459 = vmatpush1.msra.mxu0 0.0
    %1460 = vmatprep.mubr.f32.mxu0 0.0
    %1461 = vmatmul.mubr.f32.gmra.mrb[0].mxu0 %v185
    %v1462 = vpop.f32.mrb[0].mxu0
    %v1463 = vadd.f32 0.0, %v1462
    %v1464 = vpop.f32.mrb[0].mxu0
    %1465 = vdwg.mxu0
    %v1466 = vadd.f32 %v1388, %v1463
    %v1467 = vmul.f32 %v1466, 0.5
    %v1468 = vtanh.pop %v1467
    %v1469 = vadd.f32 %v1468, 1.0
    %v1470 = vmul.f32 %v1469, 0.5
    %v1471 = vtanh.pop %v1466
    %v1472 = vmul.f32 %v1470, 0.0
    %1474 = vrot.lane.b32.xlu0 %v1471, 64
    %v1475 = vpop.permute.xlu0 %1474
    %v1477 = vmul.f32 %v1470, %v1475
    %1479 = vrot.lane.b32.xlu0 %v1477, 32
    %v1480 = vpop.permute.xlu0 %1479
    %v1482 = vadd.f32 %v1472, %v1480
    %v1483 = vtanh.pop %v1482
    %1485 = vrot.lane.b32.xlu0 %v1483, 64
    %v1486 = vpop.permute.xlu0 %1485
    %v1488 = vmul.f32 %v1470, %v1486
    %1490 = vrot.lane.b32.xlu0 %v1488, 32
    %v1491 = vpop.permute.xlu0 %1490
    %v1492 = vsel %vm183, %v1491, 0
    %1494 = vmatprep.subr.mxu0 0.0
    %1495 = vmatpush1.msra.mxu0 %v1300
    %1496 = vmatprep.subr.mxu0 0.0
    %1497 = vmatpush1.msra.mxu0 %v1301
    %1498 = vmatprep.subr.mxu0 0.0
    %1499 = vmatpush1.msra.mxu0 %v1302
    %1500 = vmatprep.subr.mxu0 0.0
    %1501 = vmatpush1.msra.mxu0 %v1303
    %1502 = vmatprep.subr.mxu0 0.0
    %1503 = vmatpush1.msra.mxu0 0.0
    %1504 = vmatprep.subr.mxu0 0.0
    %1505 = vmatpush1.msra.mxu0 0.0
    %1506 = vmatprep.subr.mxu0 0.0
    %1507 = vmatpush1.msra.mxu0 0.0
    %1508 = vmatprep.subr.mxu0 0.0
    %1509 = vmatpush1.msra.mxu0 0.0
    %1510 = vmatprep.subr.mxu0 0.0
    %1511 = vmatpush1.msra.mxu0 0.0
    %1512 = vmatprep.subr.mxu0 0.0
    %1513 = vmatpush1.msra.mxu0 0.0
    %1514 = vmatprep.subr.mxu0 0.0
    %1515 = vmatpush1.msra.mxu0 0.0
    %1516 = vmatprep.subr.mxu0 0.0
    %1517 = vmatpush1.msra.mxu0 0.0
    %1518 = vmatprep.subr.mxu0 0.0
    %1519 = vmatpush1.msra.mxu0 0.0
    %1520 = vmatprep.subr.mxu0 0.0
    %1521 = vmatpush1.msra.mxu0 0.0
    %1522 = vmatprep.subr.mxu0 0.0
    %1523 = vmatpush1.msra.mxu0 0.0
    %1524 = vmatprep.subr.mxu0 0.0
    %1525 = vmatpush1.msra.mxu0 0.0
    %1526 = vmatprep.subr.mxu0 0.0
    %1527 = vmatpush1.msra.mxu0 0.0
    %1528 = vmatprep.subr.mxu0 0.0
    %1529 = vmatpush1.msra.mxu0 0.0
    %1530 = vmatprep.subr.mxu0 0.0
    %1531 = vmatpush1.msra.mxu0 0.0
    %1532 = vmatprep.subr.mxu0 0.0
    %1533 = vmatpush1.msra.mxu0 0.0
    %1534 = vmatprep.subr.mxu0 0.0
    %1535 = vmatpush1.msra.mxu0 0.0
    %1536 = vmatprep.subr.mxu0 0.0
    %1537 = vmatpush1.msra.mxu0 0.0
    %1538 = vmatprep.subr.mxu0 0.0
    %1539 = vmatpush1.msra.mxu0 0.0
    %1540 = vmatprep.subr.mxu0 0.0
    %1541 = vmatpush1.msra.mxu0 0.0
    %1542 = vmatprep.subr.mxu0 0.0
    %1543 = vmatpush1.msra.mxu0 0.0
    %1544 = vmatprep.subr.mxu0 0.0
    %1545 = vmatpush1.msra.mxu0 0.0
    %1546 = vmatprep.subr.mxu0 0.0
    %1547 = vmatpush1.msra.mxu0 0.0
    %1548 = vmatprep.subr.mxu0 0.0
    %1549 = vmatpush1.msra.mxu0 0.0
    %1550 = vmatprep.subr.mxu0 0.0
    %1551 = vmatpush1.msra.mxu0 0.0
    %1552 = vmatprep.subr.mxu0 0.0
    %1553 = vmatpush1.msra.mxu0 0.0
    %1554 = vmatprep.subr.mxu0 0.0
    %1555 = vmatpush1.msra.mxu0 0.0
    %1556 = vmatprep.subr.mxu0 0.0
    %1557 = vmatpush1.msra.mxu0 0.0
    %1558 = vmatprep.mubr.f32.mxu0 0.0
    %1559 = vmatmul.mubr.f32.gmra.mrb[0].mxu0 %v1492
    %v1560 = vpop.f32.mrb[0].mxu0
    %v1561 = vadd.f32 0.0, %v1560
    %v1562 = vpop.f32.mrb[0].mxu0
    %1563 = vdwg.mxu0
    %v1565 = vrot.slane %v1561, 6
    %v1567 = vadd.f32 %v1388, %v1565
    %v1568 = vmul.f32 %v1567, 0.5
    %v1569 = vtanh.pop %v1568
    %v1570 = vadd.f32 %v1569, 1.0
    %v1571 = vmul.f32 %v1570, 0.5
    %v1572 = vtanh.pop %v1567
    %v1574 = vrot.slane %v1482, 6
    %v1576 = vmul.f32 %v1571, %v1574
    %1578 = vrot.lane.b32.xlu0 %v1572, 64
    %v1579 = vpop.permute.xlu0 %1578
    %v1581 = vmul.f32 %v1571, %v1579
    %1583 = vrot.lane.b32.xlu0 %v1581, 32
    %v1584 = vpop.permute.xlu0 %1583
    %v1586 = vadd.f32 %v1576, %v1584
    %v1587 = vtanh.pop %v1586
    %1589 = vrot.lane.b32.xlu0 %v1587, 64
    %v1590 = vpop.permute.xlu0 %1589
    %v1592 = vmul.f32 %v1571, %v1590
    %v1594 = vrot.slane %v1592, 2
    %1595 = vrot.lane.b32.xlu0 %v1594, 32
    %v1596 = vpop.permute.xlu0 %1595
    %v1597 = vsel %vm183, %v1596, 0
    %1599 = vmatprep.subr.mxu0 0.0
    %1600 = vmatpush1.msra.mxu0 %v1300
    %1601 = vmatprep.subr.mxu0 0.0
    %1602 = vmatpush1.msra.mxu0 %v1301
    %1603 = vmatprep.subr.mxu0 0.0
    %1604 = vmatpush1.msra.mxu0 %v1302
    %1605 = vmatprep.subr.mxu0 0.0
    %1606 = vmatpush1.msra.mxu0 %v1303
    %1607 = vmatprep.subr.mxu0 0.0
    %1608 = vmatpush1.msra.mxu0 0.0
    %1609 = vmatprep.subr.mxu0 0.0
    %1610 = vmatpush1.msra.mxu0 0.0
    %1611 = vmatprep.subr.mxu0 0.0
    %1612 = vmatpush1.msra.mxu0 0.0
    %1613 = vmatprep.subr.mxu0 0.0
    %1614 = vmatpush1.msra.mxu0 0.0
    %1615 = vmatprep.subr.mxu0 0.0
    %1616 = vmatpush1.msra.mxu0 0.0
    %1617 = vmatprep.subr.mxu0 0.0
    %1618 = vmatpush1.msra.mxu0 0.0
    %1619 = vmatprep.subr.mxu0 0.0
    %1620 = vmatpush1.msra.mxu0 0.0
    %1621 = vmatprep.subr.mxu0 0.0
    %1622 = vmatpush1.msra.mxu0 0.0
    %1623 = vmatprep.subr.mxu0 0.0
    %1624 = vmatpush1.msra.mxu0 0.0
    %1625 = vmatprep.subr.mxu0 0.0
    %1626 = vmatpush1.msra.mxu0 0.0
    %1627 = vmatprep.subr.mxu0 0.0
    %1628 = vmatpush1.msra.mxu0 0.0
    %1629 = vmatprep.subr.mxu0 0.0
    %1630 = vmatpush1.msra.mxu0 0.0
    %1631 = vmatprep.subr.mxu0 0.0
    %1632 = vmatpush1.msra.mxu0 0.0
    %1633 = vmatprep.subr.mxu0 0.0
    %1634 = vmatpush1.msra.mxu0 0.0
    %1635 = vmatprep.subr.mxu0 0.0
    %1636 = vmatpush1.msra.mxu0 0.0
    %1637 = vmatprep.subr.mxu0 0.0
    %1638 = vmatpush1.msra.mxu0 0.0
    %1639 = vmatprep.subr.mxu0 0.0
    %1640 = vmatpush1.msra.mxu0 0.0
    %1641 = vmatprep.subr.mxu0 0.0
    %1642 = vmatpush1.msra.mxu0 0.0
    %1643 = vmatprep.subr.mxu0 0.0
    %1644 = vmatpush1.msra.mxu0 0.0
    %1645 = vmatprep.subr.mxu0 0.0
    %1646 = vmatpush1.msra.mxu0 0.0
    %1647 = vmatprep.subr.mxu0 0.0
    %1648 = vmatpush1.msra.mxu0 0.0
    %1649 = vmatprep.subr.mxu0 0.0
    %1650 = vmatpush1.msra.mxu0 0.0
    %1651 = vmatprep.subr.mxu0 0.0
    %1652 = vmatpush1.msra.mxu0 0.0
    %1653 = vmatprep.subr.mxu0 0.0
    %1654 = vmatpush1.msra.mxu0 0.0
    %1655 = vmatprep.subr.mxu0 0.0
    %1656 = vmatpush1.msra.mxu0 0.0
    %1657 = vmatprep.subr.mxu0 0.0
    %1658 = vmatpush1.msra.mxu0 0.0
    %1659 = vmatprep.subr.mxu0 0.0
    %1660 = vmatpush1.msra.mxu0 0.0
    %1661 = vmatprep.subr.mxu0 0.0
    %1662 = vmatpush1.msra.mxu0 0.0
    %1663 = vmatprep.mubr.f32.mxu0 0.0
    %1664 = vmatmul.mubr.f32.gmra.mrb[0].mxu0 %v1597
    %v1665 = vpop.f32.mrb[0].mxu0
    %v1666 = vadd.f32 0.0, %v1665
    %v1667 = vpop.f32.mrb[0].mxu0
    %1668 = vdwg.mxu0
    %v1670 = vrot.slane %v1666, 4
    %v1672 = vadd.f32 %v1388, %v1670
    %v1673 = vmul.f32 %v1672, 0.5
    %v1674 = vtanh.pop %v1673
    %v1675 = vadd.f32 %v1674, 1.0
    %v1676 = vmul.f32 %v1675, 0.5
    %v1677 = vtanh.pop %v1672
    %v1679 = vrot.slane %v1586, 6
    %v1681 = vmul.f32 %v1676, %v1679
    %1683 = vrot.lane.b32.xlu0 %v1677, 64
    %v1684 = vpop.permute.xlu0 %1683
    %v1686 = vmul.f32 %v1676, %v1684
    %1688 = vrot.lane.b32.xlu0 %v1686, 32
    %v1689 = vpop.permute.xlu0 %1688
    %v1691 = vadd.f32 %v1681, %v1689
    %v1692 = vtanh.pop %v1691
    %1694 = vrot.lane.b32.xlu0 %v1692, 64
    %v1695 = vpop.permute.xlu0 %1694
    %v1697 = vmul.f32 %v1676, %v1695
    %v1699 = vrot.slane %v1697, 4
    %1700 = vrot.lane.b32.xlu0 %v1699, 32
    %v1701 = vpop.permute.xlu0 %1700
    %v1702 = vsel %vm183, %v1701, 0
    %1704 = vmatprep.subr.mxu0 0.0
    %1705 = vmatpush1.msra.mxu0 %v1300
    %1706 = vmatprep.subr.mxu0 0.0
    %1707 = vmatpush1.msra.mxu0 %v1301
    %1708 = vmatprep.subr.mxu0 0.0
    %1709 = vmatpush1.msra.mxu0 %v1302
    %1710 = vmatprep.subr.mxu0 0.0
    %1711 = vmatpush1.msra.mxu0 %v1303
    %1712 = vmatprep.subr.mxu0 0.0
    %1713 = vmatpush1.msra.mxu0 0.0
    %1714 = vmatprep.subr.mxu0 0.0
    %1715 = vmatpush1.msra.mxu0 0.0
    %1716 = vmatprep.subr.mxu0 0.0
    %1717 = vmatpush1.msra.mxu0 0.0
    %1718 = vmatprep.subr.mxu0 0.0
    %1719 = vmatpush1.msra.mxu0 0.0
    %1720 = vmatprep.subr.mxu0 0.0
    %1721 = vmatpush1.msra.mxu0 0.0
    %1722 = vmatprep.subr.mxu0 0.0
    %1723 = vmatpush1.msra.mxu0 0.0
    %1724 = vmatprep.subr.mxu0 0.0
    %1725 = vmatpush1.msra.mxu0 0.0
    %1726 = vmatprep.subr.mxu0 0.0
    %1727 = vmatpush1.msra.mxu0 0.0
    %1728 = vmatprep.subr.mxu0 0.0
    %1729 = vmatpush1.msra.mxu0 0.0
    %1730 = vmatprep.subr.mxu0 0.0
    %1731 = vmatpush1.msra.mxu0 0.0
    %1732 = vmatprep.subr.mxu0 0.0
    %1733 = vmatpush1.msra.mxu0 0.0
    %1734 = vmatprep.subr.mxu0 0.0
    %1735 = vmatpush1.msra.mxu0 0.0
    %1736 = vmatprep.subr.mxu0 0.0
    %1737 = vmatpush1.msra.mxu0 0.0
    %1738 = vmatprep.subr.mxu0 0.0
    %1739 = vmatpush1.msra.mxu0 0.0
    %1740 = vmatprep.subr.mxu0 0.0
    %1741 = vmatpush1.msra.mxu0 0.0
    %1742 = vmatprep.subr.mxu0 0.0
    %1743 = vmatpush1.msra.mxu0 0.0
    %1744 = vmatprep.subr.mxu0 0.0
    %1745 = vmatpush1.msra.mxu0 0.0
    %1746 = vmatprep.subr.mxu0 0.0
    %1747 = vmatpush1.msra.mxu0 0.0
    %1748 = vmatprep.subr.mxu0 0.0
    %1749 = vmatpush1.msra.mxu0 0.0
    %1750 = vmatprep.subr.mxu0 0.0
    %1751 = vmatpush1.msra.mxu0 0.0
    %1752 = vmatprep.subr.mxu0 0.0
    %1753 = vmatpush1.msra.mxu0 0.0
    %1754 = vmatprep.subr.mxu0 0.0
    %1755 = vmatpush1.msra.mxu0 0.0
    %1756 = vmatprep.subr.mxu0 0.0
    %1757 = vmatpush1.msra.mxu0 0.0
    %1758 = vmatprep.subr.mxu0 0.0
    %1759 = vmatpush1.msra.mxu0 0.0
    %1760 = vmatprep.subr.mxu0 0.0
    %1761 = vmatpush1.msra.mxu0 0.0
    %1762 = vmatprep.subr.mxu0 0.0
    %1763 = vmatpush1.msra.mxu0 0.0
    %1764 = vmatprep.subr.mxu0 0.0
    %1765 = vmatpush1.msra.mxu0 0.0
    %1766 = vmatprep.subr.mxu0 0.0
    %1767 = vmatpush1.msra.mxu0 0.0
    %1768 = vmatprep.mubr.f32.mxu0 0.0
    %1769 = vmatmul.mubr.f32.gmra.mrb[0].mxu0 %v1702
    %v1770 = vpop.f32.mrb[0].mxu0
    %v1771 = vadd.f32 0.0, %v1770
    %v1772 = vpop.f32.mrb[0].mxu0
    %1773 = vdwg.mxu0
    %v1775 = vrot.slane %v1771, 2
    %v1777 = vadd.f32 %v1388, %v1775
    %v1778 = vmul.f32 %v1777, 0.5
    %v1779 = vtanh.pop %v1778
    %v1780 = vadd.f32 %v1779, 1.0
    %v1781 = vmul.f32 %v1780, 0.5
    %v1782 = vtanh.pop %v1777
    %v1784 = vrot.slane %v1691, 6
    %v1786 = vmul.f32 %v1781, %v1784
    %1788 = vrot.lane.b32.xlu0 %v1782, 64
    %v1789 = vpop.permute.xlu0 %1788
    %v1791 = vmul.f32 %v1781, %v1789
    %1793 = vrot.lane.b32.xlu0 %v1791, 32
    %v1794 = vpop.permute.xlu0 %1793
    %v1796 = vadd.f32 %v1786, %v1794
    %v1797 = vtanh.pop %v1796
    %1799 = vrot.lane.b32.xlu0 %v1797, 64
    %v1800 = vpop.permute.xlu0 %1799
    %v1802 = vmul.f32 %v1781, %v1800
    %v1804 = vrot.slane %v1802, 6
    %1805 = vrot.lane.b32.xlu0 %v1804, 32
    %v1806 = vpop.permute.xlu0 %1805
    %v1807 = vsel %vm183, %v1806, 0
    %1809 = vmatprep.subr.mxu0 0.0
    %1810 = vmatpush1.msra.mxu0 %v1300
    %1811 = vmatprep.subr.mxu0 0.0
    %1812 = vmatpush1.msra.mxu0 %v1301
    %1813 = vmatprep.subr.mxu0 0.0
    %1814 = vmatpush1.msra.mxu0 %v1302
    %1815 = vmatprep.subr.mxu0 0.0
    %1816 = vmatpush1.msra.mxu0 %v1303
    %1817 = vmatprep.subr.mxu0 0.0
    %1818 = vmatpush1.msra.mxu0 0.0
    %1819 = vmatprep.subr.mxu0 0.0
    %1820 = vmatpush1.msra.mxu0 0.0
    %1821 = vmatprep.subr.mxu0 0.0
    %1822 = vmatpush1.msra.mxu0 0.0
    %1823 = vmatprep.subr.mxu0 0.0
    %1824 = vmatpush1.msra.mxu0 0.0
    %1825 = vmatprep.subr.mxu0 0.0
    %1826 = vmatpush1.msra.mxu0 0.0
    %1827 = vmatprep.subr.mxu0 0.0
    %1828 = vmatpush1.msra.mxu0 0.0
    %1829 = vmatprep.subr.mxu0 0.0
    %1830 = vmatpush1.msra.mxu0 0.0
    %1831 = vmatprep.subr.mxu0 0.0
    %1832 = vmatpush1.msra.mxu0 0.0
    %1833 = vmatprep.subr.mxu0 0.0
    %1834 = vmatpush1.msra.mxu0 0.0
    %1835 = vmatprep.subr.mxu0 0.0
    %1836 = vmatpush1.msra.mxu0 0.0
    %1837 = vmatprep.subr.mxu0 0.0
    %1838 = vmatpush1.msra.mxu0 0.0
    %1839 = vmatprep.subr.mxu0 0.0
    %1840 = vmatpush1.msra.mxu0 0.0
    %1841 = vmatprep.subr.mxu0 0.0
    %1842 = vmatpush1.msra.mxu0 0.0
    %1843 = vmatprep.subr.mxu0 0.0
    %1844 = vmatpush1.msra.mxu0 0.0
    %1845 = vmatprep.subr.mxu0 0.0
    %1846 = vmatpush1.msra.mxu0 0.0
    %1847 = vmatprep.subr.mxu0 0.0
    %1848 = vmatpush1.msra.mxu0 0.0
    %1849 = vmatprep.subr.mxu0 0.0
    %1850 = vmatpush1.msra.mxu0 0.0
    %1851 = vmatprep.subr.mxu0 0.0
    %1852 = vmatpush1.msra.mxu0 0.0
    %1853 = vmatprep.subr.mxu0 0.0
    %1854 = vmatpush1.msra.mxu0 0.0
    %1855 = vmatprep.subr.mxu0 0.0
    %1856 = vmatpush1.msra.mxu0 0.0
    %1857 = vmatprep.subr.mxu0 0.0
    %1858 = vmatpush1.msra.mxu0 0.0
    %1859 = vmatprep.subr.mxu0 0.0
    %1860 = vmatpush1.msra.mxu0 0.0
    %1861 = vmatprep.subr.mxu0 0.0
    %1862 = vmatpush1.msra.mxu0 0.0
    %1863 = vmatprep.subr.mxu0 0.0
    %1864 = vmatpush1.msra.mxu0 0.0
    %1865 = vmatprep.subr.mxu0 0.0
    %1866 = vmatpush1.msra.mxu0 0.0
    %1867 = vmatprep.subr.mxu0 0.0
    %1868 = vmatpush1.msra.mxu0 0.0
    %1869 = vmatprep.subr.mxu0 0.0
    %1870 = vmatpush1.msra.mxu0 0.0
    %1871 = vmatprep.subr.mxu0 0.0
    %1872 = vmatpush1.msra.mxu0 0.0
    %1873 = vmatprep.mubr.f32.mxu0 0.0
    %1874 = vmatmul.mubr.f32.gmra.mrb[0].mxu0 %v1807
    %v1875 = vpop.f32.mrb[0].mxu0
    %v1876 = vadd.f32 0.0, %v1875
    %v1877 = vpop.f32.mrb[0].mxu0
    %1878 = vdwg.mxu0
    %v1879 = vadd.f32 %v1393, %v1876
    %v1880 = vmul.f32 %v1879, 0.5
    %v1881 = vtanh.pop %v1880
    %v1882 = vadd.f32 %v1881, 1.0
    %v1883 = vmul.f32 %v1882, 0.5
    %v1884 = vtanh.pop %v1879
    %v1886 = vrot.slane %v1796, 6
    %v1888 = vmul.f32 %v1883, %v1886
    %1890 = vrot.lane.b32.xlu0 %v1884, 64
    %v1891 = vpop.permute.xlu0 %1890
    %v1893 = vmul.f32 %v1883, %v1891
    %1895 = vrot.lane.b32.xlu0 %v1893, 32
    %v1896 = vpop.permute.xlu0 %1895
    %v1898 = vadd.f32 %v1888, %v1896
    %v1899 = vtanh.pop %v1898
    %1901 = vrot.lane.b32.xlu0 %v1899, 64
    %v1902 = vpop.permute.xlu0 %1901
    %v1904 = vmul.f32 %v1883, %v1902
    %1906 = vrot.lane.b32.xlu0 %v1904, 32
    %v1907 = vpop.permute.xlu0 %1906
    %v1908 = vsel %vm183, %v1907, 0
    %1910 = vmatprep.subr.mxu0 0.0
    %1911 = vmatpush1.msra.mxu0 %v1300
    %1912 = vmatprep.subr.mxu0 0.0
    %1913 = vmatpush1.msra.mxu0 %v1301
    %1914 = vmatprep.subr.mxu0 0.0
    %1915 = vmatpush1.msra.mxu0 %v1302
    %1916 = vmatprep.subr.mxu0 0.0
    %1917 = vmatpush1.msra.mxu0 %v1303
    %1918 = vmatprep.subr.mxu0 0.0
    %1919 = vmatpush1.msra.mxu0 0.0
    %1920 = vmatprep.subr.mxu0 0.0
    %1921 = vmatpush1.msra.mxu0 0.0
    %1922 = vmatprep.subr.mxu0 0.0
    %1923 = vmatpush1.msra.mxu0 0.0
    %1924 = vmatprep.subr.mxu0 0.0
    %1925 = vmatpush1.msra.mxu0 0.0
    %1926 = vmatprep.subr.mxu0 0.0
    %1927 = vmatpush1.msra.mxu0 0.0
    %1928 = vmatprep.subr.mxu0 0.0
    %1929 = vmatpush1.msra.mxu0 0.0
    %1930 = vmatprep.subr.mxu0 0.0
    %1931 = vmatpush1.msra.mxu0 0.0
    %1932 = vmatprep.subr.mxu0 0.0
    %1933 = vmatpush1.msra.mxu0 0.0
    %1934 = vmatprep.subr.mxu0 0.0
    %1935 = vmatpush1.msra.mxu0 0.0
    %1936 = vmatprep.subr.mxu0 0.0
    %1937 = vmatpush1.msra.mxu0 0.0
    %1938 = vmatprep.subr.mxu0 0.0
    %1939 = vmatpush1.msra.mxu0 0.0
    %1940 = vmatprep.subr.mxu0 0.0
    %1941 = vmatpush1.msra.mxu0 0.0
    %1942 = vmatprep.subr.mxu0 0.0
    %1943 = vmatpush1.msra.mxu0 0.0
    %1944 = vmatprep.subr.mxu0 0.0
    %1945 = vmatpush1.msra.mxu0 0.0
    %1946 = vmatprep.subr.mxu0 0.0
    %1947 = vmatpush1.msra.mxu0 0.0
    %1948 = vmatprep.subr.mxu0 0.0
    %1949 = vmatpush1.msra.mxu0 0.0
    %1950 = vmatprep.subr.mxu0 0.0
    %1951 = vmatpush1.msra.mxu0 0.0
    %1952 = vmatprep.subr.mxu0 0.0
    %1953 = vmatpush1.msra.mxu0 0.0
    %1954 = vmatprep.subr.mxu0 0.0
    %1955 = vmatpush1.msra.mxu0 0.0
    %1956 = vmatprep.subr.mxu0 0.0
    %1957 = vmatpush1.msra.mxu0 0.0
    %1958 = vmatprep.subr.mxu0 0.0
    %1959 = vmatpush1.msra.mxu0 0.0
    %1960 = vmatprep.subr.mxu0 0.0
    %1961 = vmatpush1.msra.mxu0 0.0
    %1962 = vmatprep.subr.mxu0 0.0
    %1963 = vmatpush1.msra.mxu0 0.0
    %1964 = vmatprep.subr.mxu0 0.0
    %1965 = vmatpush1.msra.mxu0 0.0
    %1966 = vmatprep.subr.mxu0 0.0
    %1967 = vmatpush1.msra.mxu0 0.0
    %1968 = vmatprep.subr.mxu0 0.0
    %1969 = vmatpush1.msra.mxu0 0.0
    %1970 = vmatprep.subr.mxu0 0.0
    %1971 = vmatpush1.msra.mxu0 0.0
    %1972 = vmatprep.subr.mxu0 0.0
    %1973 = vmatpush1.msra.mxu0 0.0
    %1974 = vmatprep.mubr.f32.mxu0 0.0
    %1975 = vmatmul.mubr.f32.gmra.mrb[0].mxu0 %v1908
    %v1976 = vpop.f32.mrb[0].mxu0
    %v1977 = vadd.f32 0.0, %v1976
    %v1978 = vpop.f32.mrb[0].mxu0
    %1979 = vdwg.mxu0
    %v1981 = vrot.slane %v1977, 6
    %v1983 = vadd.f32 %v1393, %v1981
    %v1984 = vmul.f32 %v1983, 0.5
    %v1985 = vtanh.pop %v1984
    %v1986 = vadd.f32 %v1985, 1.0
    %v1987 = vmul.f32 %v1986, 0.5
    %v1988 = vtanh.pop %v1983
    %v1990 = vrot.slane %v1898, 6
    %v1992 = vmul.f32 %v1987, %v1990
    %1994 = vrot.lane.b32.xlu0 %v1988, 64
    %v1995 = vpop.permute.xlu0 %1994
    %v1997 = vmul.f32 %v1987, %v1995
    %1999 = vrot.lane.b32.xlu0 %v1997, 32
    %v2000 = vpop.permute.xlu0 %1999
    %v2002 = vadd.f32 %v1992, %v2000
    %v2003 = vtanh.pop %v2002
    %2005 = vrot.lane.b32.xlu0 %v2003, 64
    %v2006 = vpop.permute.xlu0 %2005
    %v2008 = vmul.f32 %v1987, %v2006
    %v2010 = vrot.slane %v2008, 2
    %2011 = vrot.lane.b32.xlu0 %v2010, 32
    %v2012 = vpop.permute.xlu0 %2011
    %v2013 = vsel %vm183, %v2012, 0
    %2015 = vmatprep.subr.mxu0 0.0
    %2016 = vmatpush1.msra.mxu0 %v1300
    %2017 = vmatprep.subr.mxu0 0.0
    %2018 = vmatpush1.msra.mxu0 %v1301
    %2019 = vmatprep.subr.mxu0 0.0
    %2020 = vmatpush1.msra.mxu0 %v1302
    %2021 = vmatprep.subr.mxu0 0.0
    %2022 = vmatpush1.msra.mxu0 %v1303
    %2023 = vmatprep.subr.mxu0 0.0
    %2024 = vmatpush1.msra.mxu0 0.0
    %2025 = vmatprep.subr.mxu0 0.0
    %2026 = vmatpush1.msra.mxu0 0.0
    %2027 = vmatprep.subr.mxu0 0.0
    %2028 = vmatpush1.msra.mxu0 0.0
    %2029 = vmatprep.subr.mxu0 0.0
    %2030 = vmatpush1.msra.mxu0 0.0
    %2031 = vmatprep.subr.mxu0 0.0
    %2032 = vmatpush1.msra.mxu0 0.0
    %2033 = vmatprep.subr.mxu0 0.0
    %2034 = vmatpush1.msra.mxu0 0.0
    %2035 = vmatprep.subr.mxu0 0.0
    %2036 = vmatpush1.msra.mxu0 0.0
    %2037 = vmatprep.subr.mxu0 0.0
    %2038 = vmatpush1.msra.mxu0 0.0
    %2039 = vmatprep.subr.mxu0 0.0
    %2040 = vmatpush1.msra.mxu0 0.0
    %2041 = vmatprep.subr.mxu0 0.0
    %2042 = vmatpush1.msra.mxu0 0.0
    %2043 = vmatprep.subr.mxu0 0.0
    %2044 = vmatpush1.msra.mxu0 0.0
    %2045 = vmatprep.subr.mxu0 0.0
    %2046 = vmatpush1.msra.mxu0 0.0
    %2047 = vmatprep.subr.mxu0 0.0
    %2048 = vmatpush1.msra.mxu0 0.0
    %2049 = vmatprep.subr.mxu0 0.0
    %2050 = vmatpush1.msra.mxu0 0.0
    %2051 = vmatprep.subr.mxu0 0.0
    %2052 = vmatpush1.msra.mxu0 0.0
    %2053 = vmatprep.subr.mxu0 0.0
    %2054 = vmatpush1.msra.mxu0 0.0
    %2055 = vmatprep.subr.mxu0 0.0
    %2056 = vmatpush1.msra.mxu0 0.0
    %2057 = vmatprep.subr.mxu0 0.0
    %2058 = vmatpush1.msra.mxu0 0.0
    %2059 = vmatprep.subr.mxu0 0.0
    %2060 = vmatpush1.msra.mxu0 0.0
    %2061 = vmatprep.subr.mxu0 0.0
    %2062 = vmatpush1.msra.mxu0 0.0
    %2063 = vmatprep.subr.mxu0 0.0
    %2064 = vmatpush1.msra.mxu0 0.0
    %2065 = vmatprep.subr.mxu0 0.0
    %2066 = vmatpush1.msra.mxu0 0.0
    %2067 = vmatprep.subr.mxu0 0.0
    %2068 = vmatpush1.msra.mxu0 0.0
    %2069 = vmatprep.subr.mxu0 0.0
    %2070 = vmatpush1.msra.mxu0 0.0
    %2071 = vmatprep.subr.mxu0 0.0
    %2072 = vmatpush1.msra.mxu0 0.0
    %2073 = vmatprep.subr.mxu0 0.0
    %2074 = vmatpush1.msra.mxu0 0.0
    %2075 = vmatprep.subr.mxu0 0.0
    %2076 = vmatpush1.msra.mxu0 0.0
    %2077 = vmatprep.subr.mxu0 0.0
    %2078 = vmatpush1.msra.mxu0 0.0
    %2079 = vmatprep.mubr.f32.mxu0 0.0
    %2080 = vmatmul.mubr.f32.gmra.mrb[0].mxu0 %v2013
    %v2081 = vpop.f32.mrb[0].mxu0
    %v2082 = vadd.f32 0.0, %v2081
    %v2083 = vpop.f32.mrb[0].mxu0
    %2084 = vdwg.mxu0
    %v2086 = vrot.slane %v2082, 4
    %v2088 = vadd.f32 %v1393, %v2086
    %v2089 = vmul.f32 %v2088, 0.5
    %v2090 = vtanh.pop %v2089
    %v2091 = vadd.f32 %v2090, 1.0
    %v2092 = vmul.f32 %v2091, 0.5
    %v2093 = vtanh.pop %v2088
    %v2095 = vrot.slane %v2002, 6
    %v2097 = vmul.f32 %v2092, %v2095
    %2099 = vrot.lane.b32.xlu0 %v2093, 64
    %v2100 = vpop.permute.xlu0 %2099
    %v2102 = vmul.f32 %v2092, %v2100
    %2104 = vrot.lane.b32.xlu0 %v2102, 32
    %v2105 = vpop.permute.xlu0 %2104
    %v2107 = vadd.f32 %v2097, %v2105
    %v2108 = vtanh.pop %v2107
    %2110 = vrot.lane.b32.xlu0 %v2108, 64
    %v2111 = vpop.permute.xlu0 %2110
    %v2113 = vmul.f32 %v2092, %v2111
    %v2115 = vrot.slane %v2113, 4
    %2116 = vrot.lane.b32.xlu0 %v2115, 32
    %v2117 = vpop.permute.xlu0 %2116
    %v2118 = vsel %vm183, %v2117, 0
    %2120 = vmatprep.subr.mxu0 0.0
    %2121 = vmatpush1.msra.mxu0 %v1300
    %2122 = vmatprep.subr.mxu0 0.0
    %2123 = vmatpush1.msra.mxu0 %v1301
    %2124 = vmatprep.subr.mxu0 0.0
    %2125 = vmatpush1.msra.mxu0 %v1302
    %2126 = vmatprep.subr.mxu0 0.0
    %2127 = vmatpush1.msra.mxu0 %v1303
    %2128 = vmatprep.subr.mxu0 0.0
    %2129 = vmatpush1.msra.mxu0 0.0
    %2130 = vmatprep.subr.mxu0 0.0
    %2131 = vmatpush1.msra.mxu0 0.0
    %2132 = vmatprep.subr.mxu0 0.0
    %2133 = vmatpush1.msra.mxu0 0.0
    %2134 = vmatprep.subr.mxu0 0.0
    %2135 = vmatpush1.msra.mxu0 0.0
    %2136 = vmatprep.subr.mxu0 0.0
    %2137 = vmatpush1.msra.mxu0 0.0
    %2138 = vmatprep.subr.mxu0 0.0
    %2139 = vmatpush1.msra.mxu0 0.0
    %2140 = vmatprep.subr.mxu0 0.0
    %2141 = vmatpush1.msra.mxu0 0.0
    %2142 = vmatprep.subr.mxu0 0.0
    %2143 = vmatpush1.msra.mxu0 0.0
    %2144 = vmatprep.subr.mxu0 0.0
    %2145 = vmatpush1.msra.mxu0 0.0
    %2146 = vmatprep.subr.mxu0 0.0
    %2147 = vmatpush1.msra.mxu0 0.0
    %2148 = vmatprep.subr.mxu0 0.0
    %2149 = vmatpush1.msra.mxu0 0.0
    %2150 = vmatprep.subr.mxu0 0.0
    %2151 = vmatpush1.msra.mxu0 0.0
    %2152 = vmatprep.subr.mxu0 0.0
    %2153 = vmatpush1.msra.mxu0 0.0
    %2154 = vmatprep.subr.mxu0 0.0
    %2155 = vmatpush1.msra.mxu0 0.0
    %2156 = vmatprep.subr.mxu0 0.0
    %2157 = vmatpush1.msra.mxu0 0.0
    %2158 = vmatprep.subr.mxu0 0.0
    %2159 = vmatpush1.msra.mxu0 0.0
    %2160 = vmatprep.subr.mxu0 0.0
    %2161 = vmatpush1.msra.mxu0 0.0
    %2162 = vmatprep.subr.mxu0 0.0
    %2163 = vmatpush1.msra.mxu0 0.0
    %2164 = vmatprep.subr.mxu0 0.0
    %2165 = vmatpush1.msra.mxu0 0.0
    %2166 = vmatprep.subr.mxu0 0.0
    %2167 = vmatpush1.msra.mxu0 0.0
    %2168 = vmatprep.subr.mxu0 0.0
    %2169 = vmatpush1.msra.mxu0 0.0
    %2170 = vmatprep.subr.mxu0 0.0
    %2171 = vmatpush1.msra.mxu0 0.0
    %2172 = vmatprep.subr.mxu0 0.0
    %2173 = vmatpush1.msra.mxu0 0.0
    %2174 = vmatprep.subr.mxu0 0.0
    %2175 = vmatpush1.msra.mxu0 0.0
    %2176 = vmatprep.subr.mxu0 0.0
    %2177 = vmatpush1.msra.mxu0 0.0
    %2178 = vmatprep.subr.mxu0 0.0
    %2179 = vmatpush1.msra.mxu0 0.0
    %2180 = vmatprep.subr.mxu0 0.0
    %2181 = vmatpush1.msra.mxu0 0.0
    %2182 = vmatprep.subr.mxu0 0.0
    %2183 = vmatpush1.msra.mxu0 0.0
    %2184 = vmatprep.mubr.f32.mxu0 0.0
    %2185 = vmatmul.mubr.f32.gmra.mrb[0].mxu0 %v2118
    %v2186 = vpop.f32.mrb[0].mxu0
    %v2187 = vadd.f32 0.0, %v2186
    %v2188 = vpop.f32.mrb[0].mxu0
    %2189 = vdwg.mxu0
    %v2191 = vrot.slane %v2187, 2
    %v2193 = vadd.f32 %v1393, %v2191
    %v2194 = vmul.f32 %v2193, 0.5
    %v2195 = vtanh.pop %v2194
    %v2196 = vadd.f32 %v2195, 1.0
    %v2197 = vmul.f32 %v2196, 0.5
    %v2198 = vtanh.pop %v2193
    %v2200 = vrot.slane %v2107, 6
    %v2202 = vmul.f32 %v2197, %v2200
    %2204 = vrot.lane.b32.xlu0 %v2198, 64
    %v2205 = vpop.permute.xlu0 %2204
    %v2207 = vmul.f32 %v2197, %v2205
    %2209 = vrot.lane.b32.xlu0 %v2207, 32
    %v2210 = vpop.permute.xlu0 %2209
    %v2212 = vadd.f32 %v2202, %v2210
    %v2213 = vtanh.pop %v2212
    %2215 = vrot.lane.b32.xlu0 %v2213, 64
    %v2216 = vpop.permute.xlu0 %2215
    %v2218 = vmul.f32 %v2197, %v2216
    %v2219 = vld [vmem:[%s7] sm:$0xff]
    %v2220 = vld [vmem:[%s7 + $0x8] sm:$0xff]
    %v2221 = vld [vmem:[%s7 + $0x10] sm:$0xff]
    %v2222 = vld [vmem:[%s7 + $0x18] sm:$0xff]
    %v2223 = vld [vmem:[#allocation8] sm:$0x1]
    %v2225 = vlaneseq
    %v2226 = vshrl.u32 %v2225, 7
    %v2227 = vsub.s32 0, %v2226
    %v2228 = vrot.slane %v2223, %v2227
    %v2231 = vrot.slane %v2218, 6
    %2232 = vrot.lane.b32.xlu0 %v2231, 32
    %v2233 = vpop.permute.xlu0 %2232
    %v2234 = vsel %vm183, %v2233, 0
    %2236 = vmatprep.subr.mxu0 0.0
    %2237 = vmatpush1.msra.mxu0 %v2219
    %2238 = vmatprep.subr.mxu0 0.0
    %2239 = vmatpush1.msra.mxu0 %v2220
    %2240 = vmatprep.subr.mxu0 0.0
    %2241 = vmatpush1.msra.mxu0 %v2221
    %2242 = vmatprep.subr.mxu0 0.0
    %2243 = vmatpush1.msra.mxu0 %v2222
    %2244 = vmatprep.subr.mxu0 0.0
    %2245 = vmatpush1.msra.mxu0 0.0
    %2246 = vmatprep.subr.mxu0 0.0
    %2247 = vmatpush1.msra.mxu0 0.0
    %2248 = vmatprep.subr.mxu0 0.0
    %2249 = vmatpush1.msra.mxu0 0.0
    %2250 = vmatprep.subr.mxu0 0.0
    %2251 = vmatpush1.msra.mxu0 0.0
    %2252 = vmatprep.subr.mxu0 0.0
    %2253 = vmatpush1.msra.mxu0 0.0
    %2254 = vmatprep.subr.mxu0 0.0
    %2255 = vmatpush1.msra.mxu0 0.0
    %2256 = vmatprep.subr.mxu0 0.0
    %2257 = vmatpush1.msra.mxu0 0.0
    %2258 = vmatprep.subr.mxu0 0.0
    %2259 = vmatpush1.msra.mxu0 0.0
    %2260 = vmatprep.subr.mxu0 0.0
    %2261 = vmatpush1.msra.mxu0 0.0
    %2262 = vmatprep.subr.mxu0 0.0
    %2263 = vmatpush1.msra.mxu0 0.0
    %2264 = vmatprep.subr.mxu0 0.0
    %2265 = vmatpush1.msra.mxu0 0.0
    %2266 = vmatprep.subr.mxu0 0.0
    %2267 = vmatpush1.msra.mxu0 0.0
    %2268 = vmatprep.subr.mxu0 0.0
    %2269 = vmatpush1.msra.mxu0 0.0
    %2270 = vmatprep.subr.mxu0 0.0
    %2271 = vmatpush1.msra.mxu0 0.0
    %2272 = vmatprep.subr.mxu0 0.0
    %2273 = vmatpush1.msra.mxu0 0.0
    %2274 = vmatprep.subr.mxu0 0.0
    %2275 = vmatpush1.msra.mxu0 0.0
    %2276 = vmatprep.subr.mxu0 0.0
    %2277 = vmatpush1.msra.mxu0 0.0
    %2278 = vmatprep.subr.mxu0 0.0
    %2279 = vmatpush1.msra.mxu0 0.0
    %2280 = vmatprep.subr.mxu0 0.0
    %2281 = vmatpush1.msra.mxu0 0.0
    %2282 = vmatprep.subr.mxu0 0.0
    %2283 = vmatpush1.msra.mxu0 0.0
    %2284 = vmatprep.subr.mxu0 0.0
    %2285 = vmatpush1.msra.mxu0 0.0
    %2286 = vmatprep.subr.mxu0 0.0
    %2287 = vmatpush1.msra.mxu0 0.0
    %2288 = vmatprep.subr.mxu0 0.0
    %2289 = vmatpush1.msra.mxu0 0.0
    %2290 = vmatprep.subr.mxu0 0.0
    %2291 = vmatpush1.msra.mxu0 0.0
    %2292 = vmatprep.subr.mxu0 0.0
    %2293 = vmatpush1.msra.mxu0 0.0
    %2294 = vmatprep.subr.mxu0 0.0
    %2295 = vmatpush1.msra.mxu0 0.0
    %2296 = vmatprep.subr.mxu0 0.0
    %2297 = vmatpush1.msra.mxu0 0.0
    %2298 = vmatprep.subr.mxu0 0.0
    %2299 = vmatpush1.msra.mxu0 0.0
    %2300 = vmatprep.mubr.f32.mxu0 0.0
    %2301 = vmatmul.mubr.f32.gmra.mrb[0].mxu0 %v2234
    %v2302 = vpop.f32.mrb[0].mxu0
    %v2303 = vadd.f32 %v2228, %v2302
    %v2304 = vpop.f32.mrb[0].mxu0
    %2305 = vdwg.mxu0
    %vm2306 = vcmask 25600
    %2307 = vst.msk [vmem:[#allocation10] sm:$0x3] %vm2306, %v2303
    // Predicated region
    $region54: #{lstm_classifier_forward.1} parent=1 // pred_check
      _
    $region55: #{lstm_classifier_forward.1} parent=1 // pred_check_branch
      %2309 = sbr.rel (0) target = $region57
    $region56: #{lstm_classifier_forward.1} parent=1 // pred_region
      %s2311 = ssub.s32 32, 32
      %2312 = vsyncadd [#allocation4], %s2311
      %s2314 = sshll.u32 [#allocation10], 4
      %s2315 = int_to_ptr.vmem [resolvable:$true] %s2314
      %2317 = dma.vmem_to_hbm [thread:$0]  %s2315, 32, %s9, [#allocation4]
    $region57: #{lstm_classifier_forward.1} parent=1 // pred_fallthru
      _
    // Predicated region
    $region58: #{lstm_classifier_forward.1} parent=1 // pred_check
      _
    $region59: #{lstm_classifier_forward.1} parent=1 // pred_check_branch
      %2319 = sbr.rel (0) target = $region61
    $region60: #{lstm_classifier_forward.1} parent=1 // pred_region
      %2320 = dma.done [#allocation4], 32
    $region61: #{lstm_classifier_forward.1} parent=1 // pred_fallthru
      _
    %2321 = vsyncpa [#allocation3], 1
    %2322 = vsyncpa [#allocation6], 1
    %2323 = vsyncpa [#allocation9], 1
    %2324 = vsyncpa [#allocation4], 1

</llo_original>
